<compile_context>
chip_gen: v5e
topology: v5e:2x2
jax: 0.10.0
libtpu: 0.0.40
codegen_flags: <defaults>
</compile_context>

<pallas_src>
import jax
import jax.numpy as jnp
from jax import lax
from jax.experimental import pallas as pl
from jax.experimental.pallas import tpu as pltpu


# ---------------------------------------------------------------------------
# kernels
# ---------------------------------------------------------------------------

def _make_tf_kernel(chunk, compute_dtype):
    """Teacher-forcing kernel: one grid step == `chunk` timesteps."""

    def kernel(obs_ref, keep_ref, state0_ref, conmat_ref, a_t_ref,
               exp_ref, state_ref, state_acc):
        t = pl.program_id(1)

        @pl.when(t == 0)
        def _():
            state_acc[...] = state0_ref[...]

        conmat = conmat_ref[...]            # (O_pad, H_pad) compute_dtype
        a_t = a_t_ref[...]                  # (H_pad, H_pad) compute_dtype

        def step(c, state):                 # state: (TB, H_pad) f32
            # expectation = state @ ConMat.T ; ConMat consumed in stored (O,H)
            # layout by contracting last dims -> no in-kernel transpose.
            expectation = lax.dot_general(
                state.astype(compute_dtype), conmat,
                dimension_numbers=(((1,), (1,)), ((), ())),
                preferred_element_type=jnp.float32)          # (TB, O_pad)
            exp_ref[c] = expectation

            delta = obs_ref[c] - expectation                 # f32
            pdelta = delta * keep_ref[c]                     # drop w/ prob p, unscaled
            teach = jnp.dot(pdelta.astype(compute_dtype), conmat,
                            preferred_element_type=jnp.float32)   # (TB, H_pad)
            r_state = state - teach
            next_state = jnp.dot(jnp.tanh(r_state).astype(compute_dtype), a_t,
                                 preferred_element_type=jnp.float32)
            state_ref[c] = next_state
            return next_state

        state_acc[...] = lax.fori_loop(0, chunk, step, state_acc[...],
                                       unroll=True)

    return kernel


def _make_free_kernel(chunk, compute_dtype):
    """Free-running kernel: only the state recurrence (tanh + one MXU op/step)."""

    def kernel(state0_ref, a_t_ref, state_ref, state_acc):
        t = pl.program_id(1)

        @pl.when(t == 0)
        def _():
            state_acc[...] = state0_ref[...]

        a_t = a_t_ref[...]

        def step(c, state):
            next_state = jnp.dot(jnp.tanh(state).astype(compute_dtype), a_t,
                                 preferred_element_type=jnp.float32)
            state_ref[c] = next_state
            return next_state

        state_acc[...] = lax.fori_loop(0, chunk, step, state_acc[...],
                                       unroll=True)

    return kernel


# ---------------------------------------------------------------------------
# wrappers
# ---------------------------------------------------------------------------

def _round_up(x, m):
    return ((x + m - 1) // m) * m


def ptf_cell_sequence_forward(state, a_weight, conmat, teacher_forcing,
                              prob=0.0, observations=None, num_steps=None,
                              key=None, keep_mask=None,
                              compute_dtype=jnp.bfloat16, time_chunk=8):
    """Run T fused ptf_cell steps in one pallas_call.

    state       : (H,) or (B, H)
    a_weight    : (H, H) torch Linear layout (out, in)
    conmat      : (O, H)
    observations: (T, O) / (T, B, O) when teacher_forcing, else None
    keep_mask   : optional explicit dropout keep mask (T, O)/(T, B, O)
    Returns (expectations, states, deltas, partial_deltas) stacked over T
    (deltas / partial_deltas are None when teacher_forcing is False).
    """
    state = jnp.asarray(state, jnp.float32)
    a_weight = jnp.asarray(a_weight, jnp.float32)
    conmat = jnp.asarray(conmat, jnp.float32)

    squeeze_batch = state.ndim == 1
    if squeeze_batch:
        state = state[None, :]
    B, H = state.shape
    O = conmat.shape[0]

    if teacher_forcing:
        if observations is None:
            raise ValueError(
                "`observation` must be provided when `teacher_forcing` is True.")
        observations = jnp.asarray(observations, jnp.float32)
        if squeeze_batch:
            observations = observations[:, None, :]          # (T, 1, O)
        T = observations.shape[0]
    else:
        T = int(num_steps) if num_steps is not None else 1

    # --- TPU layout padding: batch -> multiple of 8 (f32 sublane), lanes -> 128
    B_pad = max(8, _round_up(B, 8))
    H_pad = _round_up(H, 128)
    O_pad = _round_up(O, 128)

    # leading "parallel" batch-tile axis (v7x megacore; single tile elsewhere)
    nbt = 2 if (B_pad >= 16 and B_pad % 16 == 0) else 1
    TB = B_pad // nbt

    # timestep chunking
    C = max(1, min(int(time_chunk), T))
    T_pad = _round_up(T, C)
    n_tc = T_pad // C

    wdt = jnp.dtype(compute_dtype)

    # hoisted once (not per step): transpose + pad + cast of the weights
    a_t_pad = jnp.pad(a_weight.T, ((0, H_pad - H), (0, H_pad - H))).astype(compute_dtype)
    conmat_pad = jnp.pad(conmat, ((0, O_pad - O), (0, H_pad - H))).astype(compute_dtype)
    state_pad = jnp.pad(state, ((0, B_pad - B), (0, H_pad - H)))      # f32

    resident2d = lambda shape: pl.BlockSpec(shape, lambda b, t: (0, 0))
    state0_spec = pl.BlockSpec((TB, H_pad), lambda b, t: (b, 0))
    per_step = lambda last: pl.BlockSpec((C, TB, last), lambda b, t: (t, b, 0))

    def _vmem_limit(per_step_bytes):
        resident = (H_pad * H_pad + O_pad * H_pad) * wdt.itemsize     # weights
        resident += 2 * TB * H_pad * 4                                # state0 (x2 buf)
        resident += TB * H_pad * 4                                    # carried state
        needed = resident + 2 * per_step_bytes                        # double-buffered
        return int(min(max(needed * 3 // 2 + (2 << 20), 32 << 20), 64 << 20))

    scratch = [pltpu.VMEM((TB, H_pad), jnp.float32)]                  # carried state

    if teacher_forcing:
        obs_pad = jnp.pad(observations,
                          ((0, T_pad - T), (0, B_pad - B), (0, O_pad - O)))

        # partial-teacher-forcing dropout keep mask: keep w/ prob (1-p),
        # kept values UNSCALED (the torch module multiplies dropout output by 1-p).
        if keep_mask is not None:
            keep = jnp.asarray(keep_mask, jnp.float32)
            if squeeze_batch and keep.ndim == 2:
                keep = keep[:, None, :]
            keep = jnp.broadcast_to(keep, (T, B, O))
        elif prob and float(prob) > 0.0:
            if key is None:
                raise ValueError("`key` (or `keep_mask`) is required when prob > 0.")
            keep = jax.random.bernoulli(
                key, 1.0 - float(prob), (T, B, O)).astype(jnp.float32)
        else:
            keep = jnp.ones((T, B, O), jnp.float32)
        keep_pad = jnp.pad(keep, ((0, T_pad - T), (0, B_pad - B), (0, O_pad - O)))

        per_step_bytes = C * TB * (3 * O_pad + H_pad) * 4
        cparams = pltpu.CompilerParams(
            dimension_semantics=("parallel", "arbitrary"),
            vmem_limit_bytes=_vmem_limit(per_step_bytes))

        exp_p, states_p = pl.pallas_call(
            _make_tf_kernel(C, compute_dtype),
            grid=(nbt, n_tc),
            out_shape=(jax.ShapeDtypeStruct((T_pad, B_pad, O_pad), jnp.float32),
                       jax.ShapeDtypeStruct((T_pad, B_pad, H_pad), jnp.float32)),
            in_specs=[per_step(O_pad),                  # observations
                      per_step(O_pad),                  # keep mask
                      state0_spec,                      # initial state (per tile)
                      resident2d((O_pad, H_pad)),       # ConMat  (resident)
                      resident2d((H_pad, H_pad))],      # A^T     (resident)
            out_specs=(per_step(O_pad), per_step(H_pad)),
            scratch_shapes=scratch,
            compiler_params=cparams,
        )(obs_pad, keep_pad, state_pad, conmat_pad, a_t_pad)

        exps = exp_p[:T, :B, :O]
        states = states_p[:T, :B, :H]
        # delta / partial_delta recomputed outside the kernel (bit-identical to
        # the in-kernel values) -> two fewer per-step output DMA streams.
        deltas = observations - exps
        pdeltas = deltas * keep
        if squeeze_batch:
            exps, states = exps[:, 0], states[:, 0]
            deltas, pdeltas = deltas[:, 0], pdeltas[:, 0]
        return exps, states, deltas, pdeltas

    # --- free-running path: only the recurrence runs serially in the kernel ---
    per_step_bytes = C * TB * H_pad * 4
    cparams = pltpu.CompilerParams(
        dimension_semantics=("parallel", "arbitrary"),
        vmem_limit_bytes=_vmem_limit(per_step_bytes))

    states_p = pl.pallas_call(
        _make_free_kernel(C, compute_dtype),
        grid=(nbt, n_tc),
        out_shape=jax.ShapeDtypeStruct((T_pad, B_pad, H_pad), jnp.float32),
        in_specs=[state0_spec, resident2d((H_pad, H_pad))],
        out_specs=per_step(H_pad),
        scratch_shapes=scratch,
        compiler_params=cparams,
    )(state_pad, a_t_pad)

    states = states_p[:T, :B, :H]
    # expectations off the serial path: one batched matmul over pre-update states
    states_in = jnp.concatenate([state[None], states[:-1]], axis=0)   # (T, B, H)
    exps = jnp.einsum('tbh,oh->tbo',
                      states_in.astype(compute_dtype),
                      conmat.astype(compute_dtype),
                      preferred_element_type=jnp.float32)
    if squeeze_batch:
        exps, states = exps[:, 0], states[:, 0]
    return exps, states, None, None


def ptf_cell_forward(state, a_weight, conmat, teacher_forcing,
                     prob=0.0, observation=None, key=None, keep_mask=None,
                     compute_dtype=jnp.bfloat16):
    """Single-step API matching the PyTorch module's forward()."""
    obs_seq = None
    if observation is not None:
        obs_seq = jnp.asarray(observation, jnp.float32)[None, ...]    # T = 1
    km = None
    if keep_mask is not None:
        km = jnp.asarray(keep_mask, jnp.float32)[None, ...]
    exps, states, deltas, pdeltas = ptf_cell_sequence_forward(
        state, a_weight, conmat, teacher_forcing, prob=prob,
        observations=obs_seq, num_steps=1, key=key, keep_mask=km,
        compute_dtype=compute_dtype, time_chunk=1)
    if teacher_forcing:
        return exps[0], states[0], deltas[0], pdeltas[0]
    return exps[0], states[0], None, None


# ---------------------------------------------------------------------------
# pure-JAX reference (optionally emulating the bf16-operand / f32-accum math)
# ---------------------------------------------------------------------------

def _reference_step(state, a_weight, conmat, teacher_forcing,
                    observation=None, keep=None, compute_dtype=jnp.float32):
    cdt = compute_dtype
    cm = conmat.astype(cdt)
    a_t = a_weight.T.astype(cdt)
    expectation = jnp.matmul(state.astype(cdt), cm.T,
                             preferred_element_type=jnp.float32)
    if teacher_forcing:
        delta = observation - expectation
        pdelta = delta if keep is None else delta * keep
        teach = jnp.matmul(pdelta.astype(cdt), cm,
                           preferred_element_type=jnp.float32)
        r_state = state - teach
        next_state = jnp.matmul(jnp.tanh(r_state).astype(cdt), a_t,
                                preferred_element_type=jnp.float32)
        return expectation, next_state, delta, pdelta
    next_state = jnp.matmul(jnp.tanh(state).astype(cdt), a_t,
                            preferred_element_type=jnp.float32)
    return expectation, next_state, None, None


# ---------------------------------------------------------------------------
# tests
# ---------------------------------------------------------------------------

def _check(name, got, want, atol):
    assert jnp.allclose(got, want, atol=atol), (
        f"{name}: max abs err = {float(jnp.max(jnp.abs(got - want)))}")


if __name__ == "__main__":
    n_obs, n_hid, T, B = 8, 32, 8, 2

    key = jax.random.PRNGKey(0)
    k_w, k_s, k_o, k_d = jax.random.split(key, 4)

    # CustomLinear weight: uniform(-0.75, 0.75), shape (out, in) = (H, H), no bias
    a_weight = jax.random.uniform(k_w, (n_hid, n_hid),
                                  minval=-0.75, maxval=0.75, dtype=jnp.float32)
    conmat = jnp.eye(n_obs, n_hid, dtype=jnp.float32)

    state0 = jax.random.normal(k_s, (B, n_hid), dtype=jnp.float32)
    observations = jax.random.normal(k_o, (T, B, n_obs), dtype=jnp.float32)

    # --- 1) f32 path, teacher forcing, prob=0: full trajectory vs reference ---
    exps, states, deltas, pdeltas = ptf_cell_sequence_forward(
        state0, a_weight, conmat, teacher_forcing=True, prob=0.0,
        observations=observations, compute_dtype=jnp.float32)
    jax.block_until_ready((exps, states, deltas, pdeltas))
    s = state0
    for t in range(T):
        r_exp, r_next, r_delta, r_pd = _reference_step(
            s, a_weight, conmat, True, observations[t])
        _check("f32 exp", exps[t], r_exp, 1e-4)
        _check("f32 state", states[t], r_next, 1e-4)
        _check("f32 delta", deltas[t], r_delta, 1e-4)
        _check("f32 pdelta", pdeltas[t], r_pd, 1e-4)
        s = r_next

    # --- 2) f32 path, non-divisible time chunk (exercises T padding) ---
    exps_c, states_c, _, _ = ptf_cell_sequence_forward(
        state0, a_weight, conmat, teacher_forcing=True, prob=0.0,
        observations=observations, compute_dtype=jnp.float32, time_chunk=3)
    jax.block_until_ready((exps_c, states_c))
    s = state0
    for t in range(T):
        r_exp, r_next, _, _ = _reference_step(s, a_weight, conmat, True,
                                              observations[t])
        _check("chunk3 exp", exps_c[t], r_exp, 1e-4)
        _check("chunk3 state", states_c[t], r_next, 1e-4)
        s = r_next

    # --- 3) f32 path, larger batch (exercises 2 batch tiles / parallel axis) ---
    B16 = 16
    state16 = jax.random.normal(jax.random.PRNGKey(7), (B16, n_hid), jnp.float32)
    obs16 = jax.random.normal(jax.random.PRNGKey(8), (4, B16, n_obs), jnp.float32)
    exps16, states16, _, _ = ptf_cell_sequence_forward(
        state16, a_weight, conmat, teacher_forcing=True, prob=0.0,
        observations=obs16, compute_dtype=jnp.float32)
    jax.block_until_ready((exps16, states16))
    s = state16
    for t in range(4):
        r_exp, r_next, _, _ = _reference_step(s, a_weight, conmat, True, obs16[t])
        _check("b16 exp", exps16[t], r_exp, 1e-4)
        _check("b16 state", states16[t], r_next, 1e-4)
        s = r_next

    # --- 4) f32 free-running path ---
    exps_f, states_f, d_f, pd_f = ptf_cell_sequence_forward(
        state0, a_weight, conmat, teacher_forcing=False, num_steps=T,
        compute_dtype=jnp.float32)
    jax.block_until_ready((exps_f, states_f))
    assert d_f is None and pd_f is None
    s = state0
    for t in range(T):
        r_exp, r_next, _, _ = _reference_step(s, a_weight, conmat, False)
        _check("free exp", exps_f[t], r_exp, 1e-4)
        _check("free state", states_f[t], r_next, 1e-4)
        s = r_next

    # --- 5) bf16 (default) path, teacher forcing: step-local consistency ---
    exps_b, states_b, _, _ = ptf_cell_sequence_forward(
        state0, a_weight, conmat, teacher_forcing=True, prob=0.0,
        observations=observations)                       # compute_dtype=bf16
    jax.block_until_ready((exps_b, states_b))
    for t in range(T):
        prev = state0 if t == 0 else states_b[t - 1]
        r_exp, r_next, _, _ = _reference_step(
            prev, a_weight, conmat, True, observations[t],
            compute_dtype=jnp.bfloat16)
        _check("bf16 exp", exps_b[t], r_exp, 2e-2)
        _check("bf16 state", states_b[t], r_next, 2e-2)

    # --- 6) bf16 path with partial dropout (explicit keep mask) ---
    keep_seq = jax.random.bernoulli(k_d, 0.6, (T, B, n_obs)).astype(jnp.float32)
    exps_d, states_d, deltas_d, pdeltas_d = ptf_cell_sequence_forward(
        state0, a_weight, conmat, teacher_forcing=True, prob=0.4,
        observations=observations, keep_mask=keep_seq)
    jax.block_until_ready((exps_d, states_d, deltas_d, pdeltas_d))
    # kept elements are UNSCALED copies of delta, dropped ones exactly 0
    assert bool(jnp.all(jnp.where(keep_seq > 0, pdeltas_d == deltas_d,
                                  pdeltas_d == 0.0)))
    for t in range(T):
        prev = state0 if t == 0 else states_d[t - 1]
        _, r_next, _, _ = _reference_step(
            prev, a_weight, conmat, True, observations[t],
            keep=keep_seq[t], compute_dtype=jnp.bfloat16)
        _check("bf16 ptf state", states_d[t], r_next, 2e-2)

    # --- 7) single cell step (module API parity), 1-D state, explicit mask ---
    state1 = state0[0]                 # (H,)
    obs1 = observations[0, 0]          # (O,)
    keep1 = jax.random.bernoulli(jax.random.PRNGKey(3), 0.6,
                                 (n_obs,)).astype(jnp.float32)
    exp_p, next_p, delta_p, pdelta_p = ptf_cell_forward(
        state1, a_weight, conmat, teacher_forcing=True, prob=0.4,
        observation=obs1, keep_mask=keep1)
    jax.block_until_ready((exp_p, next_p, delta_p, pdelta_p))
    r_exp, r_next, r_delta, r_pd = _reference_step(
        state1, a_weight, conmat, True, obs1, keep=keep1,
        compute_dtype=jnp.bfloat16)
    _check("step exp", exp_p, r_exp, 2e-2)
    _check("step state", next_p, r_next, 2e-2)
    _check("step pdelta", pdelta_p, r_pd, 2e-2)

    # --- 8) internally generated dropout mask path (requires a key) ---
    exps_r, states_r, deltas_r, pdeltas_r = ptf_cell_sequence_forward(
        state0, a_weight, conmat, teacher_forcing=True, prob=0.4,
        observations=observations, key=k_d)
    jax.block_until_ready((exps_r, states_r, deltas_r, pdeltas_r))
    assert bool(jnp.all((pdeltas_r == 0.0) |
                        jnp.isclose(pdeltas_r, deltas_r, atol=1e-6)))

    print("KERNEL_OK")
</pallas_src>

<mosaic_0001>
module attributes {stable_mosaic.version = 11 : i64} {
  func.func @kernel(%arg0: i32, %arg1: i32, %arg2: memref<8x8x128xf32, #tpu.memory_space<vmem>>, %arg3: memref<8x8x128xf32, #tpu.memory_space<vmem>>, %arg4: memref<8x128xf32, #tpu.memory_space<vmem>>, %arg5: memref<128x128xf32, #tpu.memory_space<vmem>>, %arg6: memref<128x128xf32, #tpu.memory_space<vmem>>, %arg7: memref<8x8x128xf32, #tpu.memory_space<vmem>>, %arg8: memref<8x8x128xf32, #tpu.memory_space<vmem>>, %arg9: memref<8x128xf32, #tpu.memory_space<vmem>>) attributes {dimension_semantics = [#tpu.dimension_semantics<parallel>, #tpu.dimension_semantics<arbitrary>], iteration_bounds = array<i64: 1, 1>, scalar_prefetch = 0 : i64, scratch_operands = 1 : i64, tpu.core_type = #tpu.core_type<tc>, window_params = [{transform_indices = @transform_0, window_bounds = array<i64: 8, 8, 128>}, {transform_indices = @transform_1, window_bounds = array<i64: 8, 8, 128>}, {transform_indices = @transform_2, window_bounds = array<i64: 8, 128>}, {pipeline_mode = #tpu.pipeline_mode<synchronous>, transform_indices = @transform_3, window_bounds = array<i64: 128, 128>}, {pipeline_mode = #tpu.pipeline_mode<synchronous>, transform_indices = @transform_4, window_bounds = array<i64: 128, 128>}, {transform_indices = @transform_5, window_bounds = array<i64: 8, 8, 128>}, {transform_indices = @transform_6, window_bounds = array<i64: 8, 8, 128>}]} {
    %c0_i32 = arith.constant 0 : i32
    %0 = arith.cmpi eq, %arg1, %c0_i32 : i32
    %1 = arith.extui %0 : i1 to i32
    %c0_i32_0 = arith.constant 0 : i32
    %2 = arith.cmpi ne, %1, %c0_i32_0 : i32
    scf.if %2 {
      %c0_96 = arith.constant 0 : index
      %c0_97 = arith.constant 0 : index
      %175 = vector.load %arg4[%c0_96, %c0_97] : memref<8x128xf32, #tpu.memory_space<vmem>>, vector<8x128xf32>
      %c0_98 = arith.constant 0 : index
      %c0_99 = arith.constant 0 : index
      %176 = vector.load %arg9[%c0_98, %c0_99] : memref<8x128xf32, #tpu.memory_space<vmem>>, vector<8x128xf32>
      tpu.vector_store %arg9[%c0_98, %c0_99], %175 {strides = array<i32>} : memref<8x128xf32, #tpu.memory_space<vmem>>, vector<8x128xf32>,
    } else {
    }
    %c0 = arith.constant 0 : index
    %c0_1 = arith.constant 0 : index
    %3 = vector.load %arg5[%c0, %c0_1] : memref<128x128xf32, #tpu.memory_space<vmem>>, vector<128x128xf32>
    %c0_2 = arith.constant 0 : index
    %c0_3 = arith.constant 0 : index
    %4 = vector.load %arg6[%c0_2, %c0_3] : memref<128x128xf32, #tpu.memory_space<vmem>>, vector<128x128xf32>
    %c0_4 = arith.constant 0 : index
    %c0_5 = arith.constant 0 : index
    %5 = vector.load %arg9[%c0_4, %c0_5] : memref<8x128xf32, #tpu.memory_space<vmem>>, vector<8x128xf32>
    %c0_i32_6 = arith.constant 0 : i32
    %cst = arith.constant dense<0.000000e+00> : vector<8x128xf32>
    %6 = tpu.matmul %5, %3, %cst {dimension_numbers = #tpu.dot_dimension_numbers<[1], [1], [0], [0], [0, 0, 1, 0], [], []>} : vector<8x128xf32>, vector<128x128xf32>, vector<8x128xf32> -> vector<8x128xf32>
    %7 = arith.index_cast %c0_i32_6 : i32 to index
    %c0_7 = arith.constant 0 : index
    %c0_8 = arith.constant 0 : index
    %8 = vector.load %arg7[%7, %c0_7, %c0_8] : memref<8x8x128xf32, #tpu.memory_space<vmem>>, vector<1x8x128xf32>
    %9 = vector.shape_cast %8 : vector<1x8x128xf32> to vector<8x128xf32>
    %10 = vector.shape_cast %6 : vector<8x128xf32> to vector<1x8x128xf32>
    tpu.vector_store %arg7[%7, %c0_7, %c0_8], %10 {strides = array<i32>} : memref<8x8x128xf32, #tpu.memory_space<vmem>>, vector<1x8x128xf32>,
    %11 = arith.index_cast %c0_i32_6 : i32 to index
    %c0_9 = arith.constant 0 : index
    %c0_10 = arith.constant 0 : index
    %12 = vector.load %arg2[%11, %c0_9, %c0_10] : memref<8x8x128xf32, #tpu.memory_space<vmem>>, vector<1x8x128xf32>
    %13 = vector.shape_cast %12 : vector<1x8x128xf32> to vector<8x128xf32>
    %14 = arith.subf %13, %6 : vector<8x128xf32>
    %15 = arith.index_cast %c0_i32_6 : i32 to index
    %c0_11 = arith.constant 0 : index
    %c0_12 = arith.constant 0 : index
    %16 = vector.load %arg3[%15, %c0_11, %c0_12] : memref<8x8x128xf32, #tpu.memory_space<vmem>>, vector<1x8x128xf32>
    %17 = vector.shape_cast %16 : vector<1x8x128xf32> to vector<8x128xf32>
    %18 = arith.mulf %14, %17 : vector<8x128xf32>
    %cst_13 = arith.constant dense<0.000000e+00> : vector<8x128xf32>
    %19 = tpu.matmul %18, %3, %cst_13 {dimension_numbers = #tpu.dot_dimension_numbers<[1], [0], [0], [1], [0, 0, 1, 1], [], []>} : vector<8x128xf32>, vector<128x128xf32>, vector<8x128xf32> -> vector<8x128xf32>
    %20 = arith.subf %5, %19 : vector<8x128xf32>
    %21 = math.tanh %20 : vector<8x128xf32>
    %cst_14 = arith.constant dense<0.000000e+00> : vector<8x128xf32>
    %22 = tpu.matmul %21, %4, %cst_14 {dimension_numbers = #tpu.dot_dimension_numbers<[1], [0], [0], [1], [0, 0, 1, 1], [], []>} : vector<8x128xf32>, vector<128x128xf32>, vector<8x128xf32> -> vector<8x128xf32>
    %23 = arith.index_cast %c0_i32_6 : i32 to index
    %c0_15 = arith.constant 0 : index
    %c0_16 = arith.constant 0 : index
    %24 = vector.load %arg8[%23, %c0_15, %c0_16] : memref<8x8x128xf32, #tpu.memory_space<vmem>>, vector<1x8x128xf32>
    %25 = vector.shape_cast %24 : vector<1x8x128xf32> to vector<8x128xf32>
    %26 = vector.shape_cast %22 : vector<8x128xf32> to vector<1x8x128xf32>
    tpu.vector_store %arg8[%23, %c0_15, %c0_16], %26 {strides = array<i32>} : memref<8x8x128xf32, #tpu.memory_space<vmem>>, vector<1x8x128xf32>,
    %c1_i32 = arith.constant 1 : i32
    %cst_17 = arith.constant dense<0.000000e+00> : vector<8x128xf32>
    %27 = tpu.matmul %22, %3, %cst_17 {dimension_numbers = #tpu.dot_dimension_numbers<[1], [1], [0], [0], [0, 0, 1, 0], [], []>} : vector<8x128xf32>, vector<128x128xf32>, vector<8x128xf32> -> vector<8x128xf32>
    %28 = arith.index_cast %c1_i32 : i32 to index
    %c0_18 = arith.constant 0 : index
    %c0_19 = arith.constant 0 : index
    %29 = vector.load %arg7[%28, %c0_18, %c0_19] : memref<8x8x128xf32, #tpu.memory_space<vmem>>, vector<1x8x128xf32>
    %30 = vector.shape_cast %29 : vector<1x8x128xf32> to vector<8x128xf32>
    %31 = vector.shape_cast %27 : vector<8x128xf32> to vector<1x8x128xf32>
    tpu.vector_store %arg7[%28, %c0_18, %c0_19], %31 {strides = array<i32>} : memref<8x8x128xf32, #tpu.memory_space<vmem>>, vector<1x8x128xf32>,
    %32 = arith.index_cast %c1_i32 : i32 to index
    %c0_20 = arith.constant 0 : index
    %c0_21 = arith.constant 0 : index
    %33 = vector.load %arg2[%32, %c0_20, %c0_21] : memref<8x8x128xf32, #tpu.memory_space<vmem>>, vector<1x8x128xf32>
    %34 = vector.shape_cast %33 : vector<1x8x128xf32> to vector<8x128xf32>
    %35 = arith.subf %34, %27 : vector<8x128xf32>
    %36 = arith.index_cast %c1_i32 : i32 to index
    %c0_22 = arith.constant 0 : index
    %c0_23 = arith.constant 0 : index
    %37 = vector.load %arg3[%36, %c0_22, %c0_23] : memref<8x8x128xf32, #tpu.memory_space<vmem>>, vector<1x8x128xf32>
    %38 = vector.shape_cast %37 : vector<1x8x128xf32> to vector<8x128xf32>
    %39 = arith.mulf %35, %38 : vector<8x128xf32>
    %cst_24 = arith.constant dense<0.000000e+00> : vector<8x128xf32>
    %40 = tpu.matmul %39, %3, %cst_24 {dimension_numbers = #tpu.dot_dimension_numbers<[1], [0], [0], [1], [0, 0, 1, 1], [], []>} : vector<8x128xf32>, vector<128x128xf32>, vector<8x128xf32> -> vector<8x128xf32>
    %41 = arith.subf %22, %40 : vector<8x128xf32>
    %42 = math.tanh %41 : vector<8x128xf32>
    %cst_25 = arith.constant dense<0.000000e+00> : vector<8x128xf32>
    %43 = tpu.matmul %42, %4, %cst_25 {dimension_numbers = #tpu.dot_dimension_numbers<[1], [0], [0], [1], [0, 0, 1, 1], [], []>} : vector<8x128xf32>, vector<128x128xf32>, vector<8x128xf32> -> vector<8x128xf32>
    %44 = arith.index_cast %c1_i32 : i32 to index
    %c0_26 = arith.constant 0 : index
    %c0_27 = arith.constant 0 : index
    %45 = vector.load %arg8[%44, %c0_26, %c0_27] : memref<8x8x128xf32, #tpu.memory_space<vmem>>, vector<1x8x128xf32>
    %46 = vector.shape_cast %45 : vector<1x8x128xf32> to vector<8x128xf32>
    %47 = vector.shape_cast %43 : vector<8x128xf32> to vector<1x8x128xf32>
    tpu.vector_store %arg8[%44, %c0_26, %c0_27], %47 {strides = array<i32>} : memref<8x8x128xf32, #tpu.memory_space<vmem>>, vector<1x8x128xf32>,
    %c2_i32 = arith.constant 2 : i32
    %cst_28 = arith.constant dense<0.000000e+00> : vector<8x128xf32>
    %48 = tpu.matmul %43, %3, %cst_28 {dimension_numbers = #tpu.dot_dimension_numbers<[1], [1], [0], [0], [0, 0, 1, 0], [], []>} : vector<8x128xf32>, vector<128x128xf32>, vector<8x128xf32> -> vector<8x128xf32>
    %49 = arith.index_cast %c2_i32 : i32 to index
    %c0_29 = arith.constant 0 : index
    %c0_30 = arith.constant 0 : index
    %50 = vector.load %arg7[%49, %c0_29, %c0_30] : memref<8x8x128xf32, #tpu.memory_space<vmem>>, vector<1x8x128xf32>
    %51 = vector.shape_cast %50 : vector<1x8x128xf32> to vector<8x128xf32>
    %52 = vector.shape_cast %48 : vector<8x128xf32> to vector<1x8x128xf32>
    tpu.vector_store %arg7[%49, %c0_29, %c0_30], %52 {strides = array<i32>} : memref<8x8x128xf32, #tpu.memory_space<vmem>>, vector<1x8x128xf32>,
    %53 = arith.index_cast %c2_i32 : i32 to index
    %c0_31 = arith.constant 0 : index
    %c0_32 = arith.constant 0 : index
    %54 = vector.load %arg2[%53, %c0_31, %c0_32] : memref<8x8x128xf32, #tpu.memory_space<vmem>>, vector<1x8x128xf32>
    %55 = vector.shape_cast %54 : vector<1x8x128xf32> to vector<8x128xf32>
    %56 = arith.subf %55, %48 : vector<8x128xf32>
    %57 = arith.index_cast %c2_i32 : i32 to index
    %c0_33 = arith.constant 0 : index
    %c0_34 = arith.constant 0 : index
    %58 = vector.load %arg3[%57, %c0_33, %c0_34] : memref<8x8x128xf32, #tpu.memory_space<vmem>>, vector<1x8x128xf32>
    %59 = vector.shape_cast %58 : vector<1x8x128xf32> to vector<8x128xf32>
    %60 = arith.mulf %56, %59 : vector<8x128xf32>
    %cst_35 = arith.constant dense<0.000000e+00> : vector<8x128xf32>
    %61 = tpu.matmul %60, %3, %cst_35 {dimension_numbers = #tpu.dot_dimension_numbers<[1], [0], [0], [1], [0, 0, 1, 1], [], []>} : vector<8x128xf32>, vector<128x128xf32>, vector<8x128xf32> -> vector<8x128xf32>
    %62 = arith.subf %43, %61 : vector<8x128xf32>
    %63 = math.tanh %62 : vector<8x128xf32>
    %cst_36 = arith.constant dense<0.000000e+00> : vector<8x128xf32>
    %64 = tpu.matmul %63, %4, %cst_36 {dimension_numbers = #tpu.dot_dimension_numbers<[1], [0], [0], [1], [0, 0, 1, 1], [], []>} : vector<8x128xf32>, vector<128x128xf32>, vector<8x128xf32> -> vector<8x128xf32>
    %65 = arith.index_cast %c2_i32 : i32 to index
    %c0_37 = arith.constant 0 : index
    %c0_38 = arith.constant 0 : index
    %66 = vector.load %arg8[%65, %c0_37, %c0_38] : memref<8x8x128xf32, #tpu.memory_space<vmem>>, vector<1x8x128xf32>
    %67 = vector.shape_cast %66 : vector<1x8x128xf32> to vector<8x128xf32>
    %68 = vector.shape_cast %64 : vector<8x128xf32> to vector<1x8x128xf32>
    tpu.vector_store %arg8[%65, %c0_37, %c0_38], %68 {strides = array<i32>} : memref<8x8x128xf32, #tpu.memory_space<vmem>>, vector<1x8x128xf32>,
    %c3_i32 = arith.constant 3 : i32
    %cst_39 = arith.constant dense<0.000000e+00> : vector<8x128xf32>
    %69 = tpu.matmul %64, %3, %cst_39 {dimension_numbers = #tpu.dot_dimension_numbers<[1], [1], [0], [0], [0, 0, 1, 0], [], []>} : vector<8x128xf32>, vector<128x128xf32>, vector<8x128xf32> -> vector<8x128xf32>
    %70 = arith.index_cast %c3_i32 : i32 to index
    %c0_40 = arith.constant 0 : index
    %c0_41 = arith.constant 0 : index
    %71 = vector.load %arg7[%70, %c0_40, %c0_41] : memref<8x8x128xf32, #tpu.memory_space<vmem>>, vector<1x8x128xf32>
    %72 = vector.shape_cast %71 : vector<1x8x128xf32> to vector<8x128xf32>
    %73 = vector.shape_cast %69 : vector<8x128xf32> to vector<1x8x128xf32>
    tpu.vector_store %arg7[%70, %c0_40, %c0_41], %73 {strides = array<i32>} : memref<8x8x128xf32, #tpu.memory_space<vmem>>, vector<1x8x128xf32>,
    %74 = arith.index_cast %c3_i32 : i32 to index
    %c0_42 = arith.constant 0 : index
    %c0_43 = arith.constant 0 : index
    %75 = vector.load %arg2[%74, %c0_42, %c0_43] : memref<8x8x128xf32, #tpu.memory_space<vmem>>, vector<1x8x128xf32>
    %76 = vector.shape_cast %75 : vector<1x8x128xf32> to vector<8x128xf32>
    %77 = arith.subf %76, %69 : vector<8x128xf32>
    %78 = arith.index_cast %c3_i32 : i32 to index
    %c0_44 = arith.constant 0 : index
    %c0_45 = arith.constant 0 : index
    %79 = vector.load %arg3[%78, %c0_44, %c0_45] : memref<8x8x128xf32, #tpu.memory_space<vmem>>, vector<1x8x128xf32>
    %80 = vector.shape_cast %79 : vector<1x8x128xf32> to vector<8x128xf32>
    %81 = arith.mulf %77, %80 : vector<8x128xf32>
    %cst_46 = arith.constant dense<0.000000e+00> : vector<8x128xf32>
    %82 = tpu.matmul %81, %3, %cst_46 {dimension_numbers = #tpu.dot_dimension_numbers<[1], [0], [0], [1], [0, 0, 1, 1], [], []>} : vector<8x128xf32>, vector<128x128xf32>, vector<8x128xf32> -> vector<8x128xf32>
    %83 = arith.subf %64, %82 : vector<8x128xf32>
    %84 = math.tanh %83 : vector<8x128xf32>
    %cst_47 = arith.constant dense<0.000000e+00> : vector<8x128xf32>
    %85 = tpu.matmul %84, %4, %cst_47 {dimension_numbers = #tpu.dot_dimension_numbers<[1], [0], [0], [1], [0, 0, 1, 1], [], []>} : vector<8x128xf32>, vector<128x128xf32>, vector<8x128xf32> -> vector<8x128xf32>
    %86 = arith.index_cast %c3_i32 : i32 to index
    %c0_48 = arith.constant 0 : index
    %c0_49 = arith.constant 0 : index
    %87 = vector.load %arg8[%86, %c0_48, %c0_49] : memref<8x8x128xf32, #tpu.memory_space<vmem>>, vector<1x8x128xf32>
    %88 = vector.shape_cast %87 : vector<1x8x128xf32> to vector<8x128xf32>
    %89 = vector.shape_cast %85 : vector<8x128xf32> to vector<1x8x128xf32>
    tpu.vector_store %arg8[%86, %c0_48, %c0_49], %89 {strides = array<i32>} : memref<8x8x128xf32, #tpu.memory_space<vmem>>, vector<1x8x128xf32>,
    %c4_i32 = arith.constant 4 : i32
    %cst_50 = arith.constant dense<0.000000e+00> : vector<8x128xf32>
    %90 = tpu.matmul %85, %3, %cst_50 {dimension_numbers = #tpu.dot_dimension_numbers<[1], [1], [0], [0], [0, 0, 1, 0], [], []>} : vector<8x128xf32>, vector<128x128xf32>, vector<8x128xf32> -> vector<8x128xf32>
    %91 = arith.index_cast %c4_i32 : i32 to index
    %c0_51 = arith.constant 0 : index
    %c0_52 = arith.constant 0 : index
    %92 = vector.load %arg7[%91, %c0_51, %c0_52] : memref<8x8x128xf32, #tpu.memory_space<vmem>>, vector<1x8x128xf32>
    %93 = vector.shape_cast %92 : vector<1x8x128xf32> to vector<8x128xf32>
    %94 = vector.shape_cast %90 : vector<8x128xf32> to vector<1x8x128xf32>
    tpu.vector_store %arg7[%91, %c0_51, %c0_52], %94 {strides = array<i32>} : memref<8x8x128xf32, #tpu.memory_space<vmem>>, vector<1x8x128xf32>,
    %95 = arith.index_cast %c4_i32 : i32 to index
    %c0_53 = arith.constant 0 : index
    %c0_54 = arith.constant 0 : index
    %96 = vector.load %arg2[%95, %c0_53, %c0_54] : memref<8x8x128xf32, #tpu.memory_space<vmem>>, vector<1x8x128xf32>
    %97 = vector.shape_cast %96 : vector<1x8x128xf32> to vector<8x128xf32>
    %98 = arith.subf %97, %90 : vector<8x128xf32>
    %99 = arith.index_cast %c4_i32 : i32 to index
    %c0_55 = arith.constant 0 : index
    %c0_56 = arith.constant 0 : index
    %100 = vector.load %arg3[%99, %c0_55, %c0_56] : memref<8x8x128xf32, #tpu.memory_space<vmem>>, vector<1x8x128xf32>
    %101 = vector.shape_cast %100 : vector<1x8x128xf32> to vector<8x128xf32>
    %102 = arith.mulf %98, %101 : vector<8x128xf32>
    %cst_57 = arith.constant dense<0.000000e+00> : vector<8x128xf32>
    %103 = tpu.matmul %102, %3, %cst_57 {dimension_numbers = #tpu.dot_dimension_numbers<[1], [0], [0], [1], [0, 0, 1, 1], [], []>} : vector<8x128xf32>, vector<128x128xf32>, vector<8x128xf32> -> vector<8x128xf32>
    %104 = arith.subf %85, %103 : vector<8x128xf32>
    %105 = math.tanh %104 : vector<8x128xf32>
    %cst_58 = arith.constant dense<0.000000e+00> : vector<8x128xf32>
    %106 = tpu.matmul %105, %4, %cst_58 {dimension_numbers = #tpu.dot_dimension_numbers<[1], [0], [0], [1], [0, 0, 1, 1], [], []>} : vector<8x128xf32>, vector<128x128xf32>, vector<8x128xf32> -> vector<8x128xf32>
    %107 = arith.index_cast %c4_i32 : i32 to index
    %c0_59 = arith.constant 0 : index
    %c0_60 = arith.constant 0 : index
    %108 = vector.load %arg8[%107, %c0_59, %c0_60] : memref<8x8x128xf32, #tpu.memory_space<vmem>>, vector<1x8x128xf32>
    %109 = vector.shape_cast %108 : vector<1x8x128xf32> to vector<8x128xf32>
    %110 = vector.shape_cast %106 : vector<8x128xf32> to vector<1x8x128xf32>
    tpu.vector_store %arg8[%107, %c0_59, %c0_60], %110 {strides = array<i32>} : memref<8x8x128xf32, #tpu.memory_space<vmem>>, vector<1x8x128xf32>,
    %c5_i32 = arith.constant 5 : i32
    %cst_61 = arith.constant dense<0.000000e+00> : vector<8x128xf32>
    %111 = tpu.matmul %106, %3, %cst_61 {dimension_numbers = #tpu.dot_dimension_numbers<[1], [1], [0], [0], [0, 0, 1, 0], [], []>} : vector<8x128xf32>, vector<128x128xf32>, vector<8x128xf32> -> vector<8x128xf32>
    %112 = arith.index_cast %c5_i32 : i32 to index
    %c0_62 = arith.constant 0 : index
    %c0_63 = arith.constant 0 : index
    %113 = vector.load %arg7[%112, %c0_62, %c0_63] : memref<8x8x128xf32, #tpu.memory_space<vmem>>, vector<1x8x128xf32>
    %114 = vector.shape_cast %113 : vector<1x8x128xf32> to vector<8x128xf32>
    %115 = vector.shape_cast %111 : vector<8x128xf32> to vector<1x8x128xf32>
    tpu.vector_store %arg7[%112, %c0_62, %c0_63], %115 {strides = array<i32>} : memref<8x8x128xf32, #tpu.memory_space<vmem>>, vector<1x8x128xf32>,
    %116 = arith.index_cast %c5_i32 : i32 to index
    %c0_64 = arith.constant 0 : index
    %c0_65 = arith.constant 0 : index
    %117 = vector.load %arg2[%116, %c0_64, %c0_65] : memref<8x8x128xf32, #tpu.memory_space<vmem>>, vector<1x8x128xf32>
    %118 = vector.shape_cast %117 : vector<1x8x128xf32> to vector<8x128xf32>
    %119 = arith.subf %118, %111 : vector<8x128xf32>
    %120 = arith.index_cast %c5_i32 : i32 to index
    %c0_66 = arith.constant 0 : index
    %c0_67 = arith.constant 0 : index
    %121 = vector.load %arg3[%120, %c0_66, %c0_67] : memref<8x8x128xf32, #tpu.memory_space<vmem>>, vector<1x8x128xf32>
    %122 = vector.shape_cast %121 : vector<1x8x128xf32> to vector<8x128xf32>
    %123 = arith.mulf %119, %122 : vector<8x128xf32>
    %cst_68 = arith.constant dense<0.000000e+00> : vector<8x128xf32>
    %124 = tpu.matmul %123, %3, %cst_68 {dimension_numbers = #tpu.dot_dimension_numbers<[1], [0], [0], [1], [0, 0, 1, 1], [], []>} : vector<8x128xf32>, vector<128x128xf32>, vector<8x128xf32> -> vector<8x128xf32>
    %125 = arith.subf %106, %124 : vector<8x128xf32>
    %126 = math.tanh %125 : vector<8x128xf32>
    %cst_69 = arith.constant dense<0.000000e+00> : vector<8x128xf32>
    %127 = tpu.matmul %126, %4, %cst_69 {dimension_numbers = #tpu.dot_dimension_numbers<[1], [0], [0], [1], [0, 0, 1, 1], [], []>} : vector<8x128xf32>, vector<128x128xf32>, vector<8x128xf32> -> vector<8x128xf32>
    %128 = arith.index_cast %c5_i32 : i32 to index
    %c0_70 = arith.constant 0 : index
    %c0_71 = arith.constant 0 : index
    %129 = vector.load %arg8[%128, %c0_70, %c0_71] : memref<8x8x128xf32, #tpu.memory_space<vmem>>, vector<1x8x128xf32>
    %130 = vector.shape_cast %129 : vector<1x8x128xf32> to vector<8x128xf32>
    %131 = vector.shape_cast %127 : vector<8x128xf32> to vector<1x8x128xf32>
    tpu.vector_store %arg8[%128, %c0_70, %c0_71], %131 {strides = array<i32>} : memref<8x8x128xf32, #tpu.memory_space<vmem>>, vector<1x8x128xf32>,
    %c6_i32 = arith.constant 6 : i32
    %cst_72 = arith.constant dense<0.000000e+00> : vector<8x128xf32>
    %132 = tpu.matmul %127, %3, %cst_72 {dimension_numbers = #tpu.dot_dimension_numbers<[1], [1], [0], [0], [0, 0, 1, 0], [], []>} : vector<8x128xf32>, vector<128x128xf32>, vector<8x128xf32> -> vector<8x128xf32>
    %133 = arith.index_cast %c6_i32 : i32 to index
    %c0_73 = arith.constant 0 : index
    %c0_74 = arith.constant 0 : index
    %134 = vector.load %arg7[%133, %c0_73, %c0_74] : memref<8x8x128xf32, #tpu.memory_space<vmem>>, vector<1x8x128xf32>
    %135 = vector.shape_cast %134 : vector<1x8x128xf32> to vector<8x128xf32>
    %136 = vector.shape_cast %132 : vector<8x128xf32> to vector<1x8x128xf32>
    tpu.vector_store %arg7[%133, %c0_73, %c0_74], %136 {strides = array<i32>} : memref<8x8x128xf32, #tpu.memory_space<vmem>>, vector<1x8x128xf32>,
    %137 = arith.index_cast %c6_i32 : i32 to index
    %c0_75 = arith.constant 0 : index
    %c0_76 = arith.constant 0 : index
    %138 = vector.load %arg2[%137, %c0_75, %c0_76] : memref<8x8x128xf32, #tpu.memory_space<vmem>>, vector<1x8x128xf32>
    %139 = vector.shape_cast %138 : vector<1x8x128xf32> to vector<8x128xf32>
    %140 = arith.subf %139, %132 : vector<8x128xf32>
    %141 = arith.index_cast %c6_i32 : i32 to index
    %c0_77 = arith.constant 0 : index
    %c0_78 = arith.constant 0 : index
    %142 = vector.load %arg3[%141, %c0_77, %c0_78] : memref<8x8x128xf32, #tpu.memory_space<vmem>>, vector<1x8x128xf32>
    %143 = vector.shape_cast %142 : vector<1x8x128xf32> to vector<8x128xf32>
    %144 = arith.mulf %140, %143 : vector<8x128xf32>
    %cst_79 = arith.constant dense<0.000000e+00> : vector<8x128xf32>
    %145 = tpu.matmul %144, %3, %cst_79 {dimension_numbers = #tpu.dot_dimension_numbers<[1], [0], [0], [1], [0, 0, 1, 1], [], []>} : vector<8x128xf32>, vector<128x128xf32>, vector<8x128xf32> -> vector<8x128xf32>
    %146 = arith.subf %127, %145 : vector<8x128xf32>
    %147 = math.tanh %146 : vector<8x128xf32>
    %cst_80 = arith.constant dense<0.000000e+00> : vector<8x128xf32>
    %148 = tpu.matmul %147, %4, %cst_80 {dimension_numbers = #tpu.dot_dimension_numbers<[1], [0], [0], [1], [0, 0, 1, 1], [], []>} : vector<8x128xf32>, vector<128x128xf32>, vector<8x128xf32> -> vector<8x128xf32>
    %149 = arith.index_cast %c6_i32 : i32 to index
    %c0_81 = arith.constant 0 : index
    %c0_82 = arith.constant 0 : index
    %150 = vector.load %arg8[%149, %c0_81, %c0_82] : memref<8x8x128xf32, #tpu.memory_space<vmem>>, vector<1x8x128xf32>
    %151 = vector.shape_cast %150 : vector<1x8x128xf32> to vector<8x128xf32>
    %152 = vector.shape_cast %148 : vector<8x128xf32> to vector<1x8x128xf32>
    tpu.vector_store %arg8[%149, %c0_81, %c0_82], %152 {strides = array<i32>} : memref<8x8x128xf32, #tpu.memory_space<vmem>>, vector<1x8x128xf32>,
    %c7_i32 = arith.constant 7 : i32
    %cst_83 = arith.constant dense<0.000000e+00> : vector<8x128xf32>
    %153 = tpu.matmul %148, %3, %cst_83 {dimension_numbers = #tpu.dot_dimension_numbers<[1], [1], [0], [0], [0, 0, 1, 0], [], []>} : vector<8x128xf32>, vector<128x128xf32>, vector<8x128xf32> -> vector<8x128xf32>
    %154 = arith.index_cast %c7_i32 : i32 to index
    %c0_84 = arith.constant 0 : index
    %c0_85 = arith.constant 0 : index
    %155 = vector.load %arg7[%154, %c0_84, %c0_85] : memref<8x8x128xf32, #tpu.memory_space<vmem>>, vector<1x8x128xf32>
    %156 = vector.shape_cast %155 : vector<1x8x128xf32> to vector<8x128xf32>
    %157 = vector.shape_cast %153 : vector<8x128xf32> to vector<1x8x128xf32>
    tpu.vector_store %arg7[%154, %c0_84, %c0_85], %157 {strides = array<i32>} : memref<8x8x128xf32, #tpu.memory_space<vmem>>, vector<1x8x128xf32>,
    %158 = arith.index_cast %c7_i32 : i32 to index
    %c0_86 = arith.constant 0 : index
    %c0_87 = arith.constant 0 : index
    %159 = vector.load %arg2[%158, %c0_86, %c0_87] : memref<8x8x128xf32, #tpu.memory_space<vmem>>, vector<1x8x128xf32>
    %160 = vector.shape_cast %159 : vector<1x8x128xf32> to vector<8x128xf32>
    %161 = arith.subf %160, %153 : vector<8x128xf32>
    %162 = arith.index_cast %c7_i32 : i32 to index
    %c0_88 = arith.constant 0 : index
    %c0_89 = arith.constant 0 : index
    %163 = vector.load %arg3[%162, %c0_88, %c0_89] : memref<8x8x128xf32, #tpu.memory_space<vmem>>, vector<1x8x128xf32>
    %164 = vector.shape_cast %163 : vector<1x8x128xf32> to vector<8x128xf32>
    %165 = arith.mulf %161, %164 : vector<8x128xf32>
    %cst_90 = arith.constant dense<0.000000e+00> : vector<8x128xf32>
    %166 = tpu.matmul %165, %3, %cst_90 {dimension_numbers = #tpu.dot_dimension_numbers<[1], [0], [0], [1], [0, 0, 1, 1], [], []>} : vector<8x128xf32>, vector<128x128xf32>, vector<8x128xf32> -> vector<8x128xf32>
    %167 = arith.subf %148, %166 : vector<8x128xf32>
    %168 = math.tanh %167 : vector<8x128xf32>
    %cst_91 = arith.constant dense<0.000000e+00> : vector<8x128xf32>
    %169 = tpu.matmul %168, %4, %cst_91 {dimension_numbers = #tpu.dot_dimension_numbers<[1], [0], [0], [1], [0, 0, 1, 1], [], []>} : vector<8x128xf32>, vector<128x128xf32>, vector<8x128xf32> -> vector<8x128xf32>
    %170 = arith.index_cast %c7_i32 : i32 to index
    %c0_92 = arith.constant 0 : index
    %c0_93 = arith.constant 0 : index
    %171 = vector.load %arg8[%170, %c0_92, %c0_93] : memref<8x8x128xf32, #tpu.memory_space<vmem>>, vector<1x8x128xf32>
    %172 = vector.shape_cast %171 : vector<1x8x128xf32> to vector<8x128xf32>
    %173 = vector.shape_cast %169 : vector<8x128xf32> to vector<1x8x128xf32>
    tpu.vector_store %arg8[%170, %c0_92, %c0_93], %173 {strides = array<i32>} : memref<8x8x128xf32, #tpu.memory_space<vmem>>, vector<1x8x128xf32>,
    %c8_i32 = arith.constant 8 : i32
    %c0_94 = arith.constant 0 : index
    %c0_95 = arith.constant 0 : index
    %174 = vector.load %arg9[%c0_94, %c0_95] : memref<8x128xf32, #tpu.memory_space<vmem>>, vector<8x128xf32>
    tpu.vector_store %arg9[%c0_94, %c0_95], %169 {strides = array<i32>} : memref<8x128xf32, #tpu.memory_space<vmem>>, vector<8x128xf32>,
    return
  }
  func.func @transform_0(%arg0: i32, %arg1: i32) -> (i32, i32, i32) {
    %c0_i32 = arith.constant 0 : i32
    %c0_i32_0 = arith.constant 0 : i32
    return %arg1, %arg0, %c0_i32 : i32, i32, i32
  }
  func.func @transform_1(%arg0: i32, %arg1: i32) -> (i32, i32, i32) {
    %c0_i32 = arith.constant 0 : i32
    %c0_i32_0 = arith.constant 0 : i32
    return %arg1, %arg0, %c0_i32 : i32, i32, i32
  }
  func.func @transform_2(%arg0: i32, %arg1: i32) -> (i32, i32) {
    %c0_i32 = arith.constant 0 : i32
    %c0_i32_0 = arith.constant 0 : i32
    return %arg0, %c0_i32 : i32, i32
  }
  func.func @transform_3(%arg0: i32, %arg1: i32) -> (i32, i32) {
    %c0_i32 = arith.constant 0 : i32
    %c0_i32_0 = arith.constant 0 : i32
    %c0_i32_1 = arith.constant 0 : i32
    return %c0_i32, %c0_i32_0 : i32, i32
  }
  func.func @transform_4(%arg0: i32, %arg1: i32) -> (i32, i32) {
    %c0_i32 = arith.constant 0 : i32
    %c0_i32_0 = arith.constant 0 : i32
    %c0_i32_1 = arith.constant 0 : i32
    return %c0_i32, %c0_i32_0 : i32, i32
  }
  func.func @transform_5(%arg0: i32, %arg1: i32) -> (i32, i32, i32) {
    %c0_i32 = arith.constant 0 : i32
    %c0_i32_0 = arith.constant 0 : i32
    return %arg1, %arg0, %c0_i32 : i32, i32, i32
  }
  func.func @transform_6(%arg0: i32, %arg1: i32) -> (i32, i32, i32) {
    %c0_i32 = arith.constant 0 : i32
    %c0_i32_0 = arith.constant 0 : i32
    return %arg1, %arg0, %c0_i32 : i32, i32, i32
  }
}

</mosaic_0001>

<llo_original>
// kernel: tpu_custom_call.1
$region0: #{tpu_custom_call.1}
  #allocation0 [shape = 'u32[]', space=smem, size = 0x4, offset = 0x4, fixed_abs, tag = 'smem constant byte address 0x4 - core index']
  #allocation1 [shape = 'u32[72,128]{1,0:T(1,128)}', space=vmem, size = 0x9000, scoped, tag = 'internal scratch']
  #allocation2 [shape = 'f32[8,128]{1,0:T(8,128)}', space=vmem, size = 0x1000, scoped, tag = 'scratch operand']
  %s0 = inlined_call_operand.hbm [shape: f32[8,8,128], index: 0, kind: input, shape index: {}]
  %s1 = inlined_call_operand.hbm [shape: f32[8,8,128], index: 1, kind: input, shape index: {}]
  %s2 = inlined_call_operand.hbm [shape: f32[8,128], index: 2, kind: input, shape index: {}]
  %s3 = inlined_call_operand.hbm [shape: f32[128,128], index: 3, kind: input, shape index: {}]
  %s4 = inlined_call_operand.hbm [shape: f32[128,128], index: 4, kind: input, shape index: {}]
  %s5 = inlined_call_operand.hbm [shape: f32[8,8,128], index: 5, kind: output, shape index: {0}]
  %s6 = inlined_call_operand.hbm [shape: f32[8,8,128], index: 6, kind: output, shape index: {1}]
  %7 = xla_tuple %s5, %s6
  %s8 = sld [smem:[#allocation0]]
  $region62: #{tpu_custom_call.1} parent=0
    _
  %s10 = ssub.s32 1, %s8
  %s11 = scalar_select 0, %s10, %s8
  $region1: #{tpu_custom_call.1} parent=0
    #allocation3 [shape = 'u8[32768]{0}', space=vmem, size = 0x8000, scoped, tag = 'input window, operand 0, single buffered']
    #allocation4 [shape = 's32[1]{0}', space=sflag, size = 0x4, scoped, tag = 'scoped memory for tpu_custom_call.1']
    #allocation5 [shape = 's32[1]{0}', space=sflag, size = 0x4, scoped, tag = 'scoped memory for tpu_custom_call.1']
    #allocation6 [shape = 'u8[32768]{0}', space=vmem, size = 0x8000, scoped, tag = 'input window, operand 1, single buffered']
    #allocation7 [shape = 's32[1]{0}', space=sflag, size = 0x4, scoped, tag = 'scoped memory for tpu_custom_call.1']
    #allocation8 [shape = 'u8[4096]{0}', space=vmem, size = 0x1000, scoped, tag = 'input window, operand 2, single buffered']
    #allocation9 [shape = 'u8[65536]{0}', space=vmem, size = 0x10000, scoped, tag = 'input window, operand 3, single buffered']
    #allocation10 [shape = 's32[1]{0}', space=sflag, size = 0x4, scoped, tag = 'scoped memory for tpu_custom_call.1']
    #allocation11 [shape = 'u8[65536]{0}', space=vmem, size = 0x10000, scoped, tag = 'input window, operand 4, single buffered']
    #allocation12 [shape = 'u8[32768]{0}', space=vmem, size = 0x8000, scoped, tag = 'output window, operand 0, single buffered']
    #allocation13 [shape = 'u8[32768]{0}', space=vmem, size = 0x8000, scoped, tag = 'output window, operand 1, single buffered']
    #allocation14 [shape = 's32[1]{0}', space=sflag, size = 0x4, scoped, tag = 'scoped memory for tpu_custom_call.1']
    %12 = vsyncpa [#allocation4], 0
    %13 = vsyncpa [#allocation7], 0
    %14 = vsyncpa [#allocation10], 0
    %15 = vsyncpa [#allocation5], 0
    %16 = vsyncpa [#allocation14], 0
    // Predicated region
    $region2: #{tpu_custom_call.1} parent=1 // pred_check
      _
    $region3: #{tpu_custom_call.1} parent=1 // pred_check_branch
      %18 = sbr.rel (0) target = $region5
    $region4: #{tpu_custom_call.1} parent=1 // pred_region
      %20 = vsyncadd [#allocation4], 0
      %s21 = sshll.u32 %s0, 4
      %s22 = int_to_ptr.hbm [resolvable:$true] %s21
      %s23 = sshll.u32 [#allocation3], 4
      %s24 = int_to_ptr.vmem [resolvable:$true] %s23
      %29 = dma.hbm_to_vmem [thread:$0]  %s22, 1024, %s24, [#allocation4], 128, 128, 8
    $region5: #{tpu_custom_call.1} parent=1 // pred_fallthru
      _
    // Predicated region
    $region6: #{tpu_custom_call.1} parent=1 // pred_check
      _
    $region7: #{tpu_custom_call.1} parent=1 // pred_check_branch
      %31 = sbr.rel (0) target = $region9
    $region8: #{tpu_custom_call.1} parent=1 // pred_region
      %33 = vsyncadd [#allocation7], 0
      %s34 = sshll.u32 %s1, 4
      %s35 = int_to_ptr.hbm [resolvable:$true] %s34
      %s36 = sshll.u32 [#allocation6], 4
      %s37 = int_to_ptr.vmem [resolvable:$true] %s36
      %42 = dma.hbm_to_vmem [thread:$0]  %s35, 1024, %s37, [#allocation7], 128, 128, 8
    $region9: #{tpu_custom_call.1} parent=1 // pred_fallthru
      _
    // Predicated region
    $region10: #{tpu_custom_call.1} parent=1 // pred_check
      _
    $region11: #{tpu_custom_call.1} parent=1 // pred_check_branch
      %44 = sbr.rel (0) target = $region13
    $region12: #{tpu_custom_call.1} parent=1 // pred_region
      %46 = vsyncadd [#allocation7], 0
      %s48 = sshll.u32 %s2, 4
      %s49 = int_to_ptr.hbm [resolvable:$true] %s48
      %s50 = sshll.u32 [#allocation8], 4
      %s51 = int_to_ptr.vmem [resolvable:$true] %s50
      %53 = dma.hbm_to_vmem [thread:$0]  %s49, 128, %s51, [#allocation7]
    $region13: #{tpu_custom_call.1} parent=1 // pred_fallthru
      _
    // Predicated region
    $region14: #{tpu_custom_call.1} parent=1 // pred_check
      _
    $region15: #{tpu_custom_call.1} parent=1 // pred_check_branch
      %55 = sbr.rel (0) target = $region17
    $region16: #{tpu_custom_call.1} parent=1 // pred_region
      %57 = vsyncadd [#allocation10], 0
      %s58 = sshll.u32 %s3, 4
      %s59 = int_to_ptr.hbm [resolvable:$true] %s58
      %s60 = sshll.u32 [#allocation9], 4
      %s61 = int_to_ptr.vmem [resolvable:$true] %s60
      %66 = dma.hbm_to_vmem [thread:$0]  %s59, 2048, %s61, [#allocation10], 128, 128, 8
    $region17: #{tpu_custom_call.1} parent=1 // pred_fallthru
      _
    // Predicated region
    $region18: #{tpu_custom_call.1} parent=1 // pred_check
      _
    $region19: #{tpu_custom_call.1} parent=1 // pred_check_branch
      %68 = sbr.rel (0) target = $region21
    $region20: #{tpu_custom_call.1} parent=1 // pred_region
      %70 = vsyncadd [#allocation10], 0
      %s71 = sshll.u32 %s4, 4
      %s72 = int_to_ptr.hbm [resolvable:$true] %s71
      %s73 = sshll.u32 [#allocation11], 4
      %s74 = int_to_ptr.vmem [resolvable:$true] %s73
      %79 = dma.hbm_to_vmem [thread:$0]  %s72, 2048, %s74, [#allocation10], 128, 128, 8
    $region21: #{tpu_custom_call.1} parent=1 // pred_fallthru
      _
    // Predicated region
    $region22: #{tpu_custom_call.1} parent=1 // pred_check
      _
    $region23: #{tpu_custom_call.1} parent=1 // pred_check_branch
      %81 = sbr.rel (0) target = $region25
    $region24: #{tpu_custom_call.1} parent=1 // pred_region
      %83 = dma.done [#allocation4], 1024
    $region25: #{tpu_custom_call.1} parent=1 // pred_fallthru
      _
    // Predicated region
    $region26: #{tpu_custom_call.1} parent=1 // pred_check
      _
    $region27: #{tpu_custom_call.1} parent=1 // pred_check_branch
      %85 = sbr.rel (0) target = $region29
    $region28: #{tpu_custom_call.1} parent=1 // pred_region
      %87 = dma.done [#allocation7], 1024
    $region29: #{tpu_custom_call.1} parent=1 // pred_fallthru
      _
    // Predicated region
    $region30: #{tpu_custom_call.1} parent=1 // pred_check
      _
    $region31: #{tpu_custom_call.1} parent=1 // pred_check_branch
      %89 = sbr.rel (0) target = $region33
    $region32: #{tpu_custom_call.1} parent=1 // pred_region
      %91 = dma.done [#allocation7], 128
    $region33: #{tpu_custom_call.1} parent=1 // pred_fallthru
      _
    // Predicated region
    $region34: #{tpu_custom_call.1} parent=1 // pred_check
      _
    $region35: #{tpu_custom_call.1} parent=1 // pred_check_branch
      %93 = sbr.rel (0) target = $region37
    $region36: #{tpu_custom_call.1} parent=1 // pred_region
      %95 = dma.done [#allocation10], 2048
    $region37: #{tpu_custom_call.1} parent=1 // pred_fallthru
      _
    // Predicated region
    $region38: #{tpu_custom_call.1} parent=1 // pred_check
      _
    $region39: #{tpu_custom_call.1} parent=1 // pred_check_branch
      %97 = sbr.rel (0) target = $region41
    $region40: #{tpu_custom_call.1} parent=1 // pred_region
      %99 = dma.done [#allocation10], 2048
    $region41: #{tpu_custom_call.1} parent=1 // pred_fallthru
      _
    %p100 = scmp.eq.s32.totalorder 0, 0
    // Predicated region
    $region42: #{tpu_custom_call.1} parent=1 // pred_check
      %p101 = pneg %p100
    $region43: #{tpu_custom_call.1} parent=1 // pred_check_branch
      %103 = sbr.rel (%p101) target = $region45
    $region44: #{tpu_custom_call.1} parent=1 // pred_region
      %v104 = vld [vmem:[#allocation8] sm:$0xff]
      %105 = vst [vmem:[#allocation2] sm:$0xff] %v104
    $region45: #{tpu_custom_call.1} parent=1 // pred_fallthru
      _
    %v106 = vld [vmem:[#allocation9] sm:$0xff]
    %v107 = vld [vmem:[#allocation9 + $0x8] sm:$0xff]
    %v108 = vld [vmem:[#allocation9 + $0x10] sm:$0xff]
    %v109 = vld [vmem:[#allocation9 + $0x18] sm:$0xff]
    %v110 = vld [vmem:[#allocation9 + $0x20] sm:$0xff]
    %v111 = vld [vmem:[#allocation9 + $0x28] sm:$0xff]
    %v112 = vld [vmem:[#allocation9 + $0x30] sm:$0xff]
    %v113 = vld [vmem:[#allocation9 + $0x38] sm:$0xff]
    %v114 = vld [vmem:[#allocation9 + $0x40] sm:$0xff]
    %v115 = vld [vmem:[#allocation9 + $0x48] sm:$0xff]
    %v116 = vld [vmem:[#allocation9 + $0x50] sm:$0xff]
    %v117 = vld [vmem:[#allocation9 + $0x58] sm:$0xff]
    %v118 = vld [vmem:[#allocation9 + $0x60] sm:$0xff]
    %v119 = vld [vmem:[#allocation9 + $0x68] sm:$0xff]
    %v120 = vld [vmem:[#allocation9 + $0x70] sm:$0xff]
    %v121 = vld [vmem:[#allocation9 + $0x78] sm:$0xff]
    %v122 = vld [vmem:[#allocation11] sm:$0xff]
    %v123 = vld [vmem:[#allocation11 + $0x8] sm:$0xff]
    %v124 = vld [vmem:[#allocation11 + $0x10] sm:$0xff]
    %v125 = vld [vmem:[#allocation11 + $0x18] sm:$0xff]
    %v126 = vld [vmem:[#allocation11 + $0x20] sm:$0xff]
    %v127 = vld [vmem:[#allocation11 + $0x28] sm:$0xff]
    %v128 = vld [vmem:[#allocation11 + $0x30] sm:$0xff]
    %v129 = vld [vmem:[#allocation11 + $0x38] sm:$0xff]
    %v130 = vld [vmem:[#allocation11 + $0x40] sm:$0xff]
    %v131 = vld [vmem:[#allocation11 + $0x48] sm:$0xff]
    %v132 = vld [vmem:[#allocation11 + $0x50] sm:$0xff]
    %v133 = vld [vmem:[#allocation11 + $0x58] sm:$0xff]
    %v134 = vld [vmem:[#allocation11 + $0x60] sm:$0xff]
    %v135 = vld [vmem:[#allocation11 + $0x68] sm:$0xff]
    %v136 = vld [vmem:[#allocation11 + $0x70] sm:$0xff]
    %v137 = vld [vmem:[#allocation11 + $0x78] sm:$0xff]
    %v138 = vld [vmem:[#allocation2] sm:$0xff]
    %139 = vmatpush.xpose.msra.mxu0 %v121
    %140 = vmatpush.xpose.msra.mxu0 %v120
    %141 = vmatpush.xpose.msra.mxu0 %v119
    %142 = vmatpush.xpose.msra.mxu0 %v118
    %143 = vmatpush.xpose.msra.mxu0 %v117
    %144 = vmatpush.xpose.msra.mxu0 %v116
    %145 = vmatpush.xpose.msra.mxu0 %v115
    %146 = vmatpush.xpose.msra.mxu0 %v114
    %147 = vmatpush.xpose.msra.mxu0 %v113
    %148 = vmatpush.xpose.msra.mxu0 %v112
    %149 = vmatpush.xpose.msra.mxu0 %v111
    %150 = vmatpush.xpose.msra.mxu0 %v110
    %151 = vmatpush.xpose.msra.mxu0 %v109
    %152 = vmatpush.xpose.msra.mxu0 %v108
    %153 = vmatpush.xpose.msra.mxu0 %v107
    %154 = vmatpush.xpose.msra.mxu0 %v106
    %155 = vmatmul.f32.gmra.mxu0 %v138
    %v156 = vpop.f32.mrf.mxu0
    %v157 = vadd.f32 0.0, %v156
    %158 = vdwg.mxu0
    %159 = vst [vmem:[#allocation12] sm:$0xff] %v157
    %v160 = vld [vmem:[#allocation3] sm:$0xff]
    %v161 = vsub.f32 %v160, %v157
    %v162 = vld [vmem:[#allocation6] sm:$0xff]
    %v163 = vmul.f32 %v161, %v162
    %164 = vmatpush.msra.mxu0 %v121
    %165 = vmatpush.msra.mxu0 %v120
    %166 = vmatpush.msra.mxu0 %v119
    %167 = vmatpush.msra.mxu0 %v118
    %168 = vmatpush.msra.mxu0 %v117
    %169 = vmatpush.msra.mxu0 %v116
    %170 = vmatpush.msra.mxu0 %v115
    %171 = vmatpush.msra.mxu0 %v114
    %172 = vmatpush.msra.mxu0 %v113
    %173 = vmatpush.msra.mxu0 %v112
    %174 = vmatpush.msra.mxu0 %v111
    %175 = vmatpush.msra.mxu0 %v110
    %176 = vmatpush.msra.mxu0 %v109
    %177 = vmatpush.msra.mxu0 %v108
    %178 = vmatpush.msra.mxu0 %v107
    %179 = vmatpush.msra.mxu0 %v106
    %180 = vmatmul.f32.gmra.mxu0 %v163
    %v181 = vpop.f32.mrf.mxu0
    %v182 = vadd.f32 0.0, %v181
    %183 = vdwg.mxu0
    %v184 = vsub.f32 %v138, %v182
    %v185 = vtanh.pop %v184
    %186 = vmatpush.msra.mxu0 %v137
    %187 = vmatpush.msra.mxu0 %v136
    %188 = vmatpush.msra.mxu0 %v135
    %189 = vmatpush.msra.mxu0 %v134
    %190 = vmatpush.msra.mxu0 %v133
    %191 = vmatpush.msra.mxu0 %v132
    %192 = vmatpush.msra.mxu0 %v131
    %193 = vmatpush.msra.mxu0 %v130
    %194 = vmatpush.msra.mxu0 %v129
    %195 = vmatpush.msra.mxu0 %v128
    %196 = vmatpush.msra.mxu0 %v127
    %197 = vmatpush.msra.mxu0 %v126
    %198 = vmatpush.msra.mxu0 %v125
    %199 = vmatpush.msra.mxu0 %v124
    %200 = vmatpush.msra.mxu0 %v123
    %201 = vmatpush.msra.mxu0 %v122
    %202 = vmatmul.f32.gmra.mxu0 %v185
    %v203 = vpop.f32.mrf.mxu0
    %v204 = vadd.f32 0.0, %v203
    %205 = vdwg.mxu0
    %206 = vst [vmem:[#allocation13] sm:$0xff] %v204
    %207 = vmatpush.xpose.msra.mxu0 %v121
    %208 = vmatpush.xpose.msra.mxu0 %v120
    %209 = vmatpush.xpose.msra.mxu0 %v119
    %210 = vmatpush.xpose.msra.mxu0 %v118
    %211 = vmatpush.xpose.msra.mxu0 %v117
    %212 = vmatpush.xpose.msra.mxu0 %v116
    %213 = vmatpush.xpose.msra.mxu0 %v115
    %214 = vmatpush.xpose.msra.mxu0 %v114
    %215 = vmatpush.xpose.msra.mxu0 %v113
    %216 = vmatpush.xpose.msra.mxu0 %v112
    %217 = vmatpush.xpose.msra.mxu0 %v111
    %218 = vmatpush.xpose.msra.mxu0 %v110
    %219 = vmatpush.xpose.msra.mxu0 %v109
    %220 = vmatpush.xpose.msra.mxu0 %v108
    %221 = vmatpush.xpose.msra.mxu0 %v107
    %222 = vmatpush.xpose.msra.mxu0 %v106
    %223 = vmatmul.f32.gmra.mxu0 %v204
    %v224 = vpop.f32.mrf.mxu0
    %v225 = vadd.f32 0.0, %v224
    %226 = vdwg.mxu0
    %s227 = scalar_lea.vmem [#allocation12], 8
    %228 = vst [vmem:[%s227] sm:$0xff] %v225
    %s229 = scalar_lea.vmem [#allocation3], 8
    %v230 = vld [vmem:[%s229] sm:$0xff]
    %v231 = vsub.f32 %v230, %v225
    %s232 = scalar_lea.vmem [#allocation6], 8
    %v233 = vld [vmem:[%s232] sm:$0xff]
    %v234 = vmul.f32 %v231, %v233
    %235 = vmatpush.msra.mxu0 %v121
    %236 = vmatpush.msra.mxu0 %v120
    %237 = vmatpush.msra.mxu0 %v119
    %238 = vmatpush.msra.mxu0 %v118
    %239 = vmatpush.msra.mxu0 %v117
    %240 = vmatpush.msra.mxu0 %v116
    %241 = vmatpush.msra.mxu0 %v115
    %242 = vmatpush.msra.mxu0 %v114
    %243 = vmatpush.msra.mxu0 %v113
    %244 = vmatpush.msra.mxu0 %v112
    %245 = vmatpush.msra.mxu0 %v111
    %246 = vmatpush.msra.mxu0 %v110
    %247 = vmatpush.msra.mxu0 %v109
    %248 = vmatpush.msra.mxu0 %v108
    %249 = vmatpush.msra.mxu0 %v107
    %250 = vmatpush.msra.mxu0 %v106
    %251 = vmatmul.f32.gmra.mxu0 %v234
    %v252 = vpop.f32.mrf.mxu0
    %v253 = vadd.f32 0.0, %v252
    %254 = vdwg.mxu0
    %v255 = vsub.f32 %v204, %v253
    %v256 = vtanh.pop %v255
    %257 = vmatpush.msra.mxu0 %v137
    %258 = vmatpush.msra.mxu0 %v136
    %259 = vmatpush.msra.mxu0 %v135
    %260 = vmatpush.msra.mxu0 %v134
    %261 = vmatpush.msra.mxu0 %v133
    %262 = vmatpush.msra.mxu0 %v132
    %263 = vmatpush.msra.mxu0 %v131
    %264 = vmatpush.msra.mxu0 %v130
    %265 = vmatpush.msra.mxu0 %v129
    %266 = vmatpush.msra.mxu0 %v128
    %267 = vmatpush.msra.mxu0 %v127
    %268 = vmatpush.msra.mxu0 %v126
    %269 = vmatpush.msra.mxu0 %v125
    %270 = vmatpush.msra.mxu0 %v124
    %271 = vmatpush.msra.mxu0 %v123
    %272 = vmatpush.msra.mxu0 %v122
    %273 = vmatmul.f32.gmra.mxu0 %v256
    %v274 = vpop.f32.mrf.mxu0
    %v275 = vadd.f32 0.0, %v274
    %276 = vdwg.mxu0
    %s277 = scalar_lea.vmem [#allocation13], 8
    %278 = vst [vmem:[%s277] sm:$0xff] %v275
    %279 = vmatpush.xpose.msra.mxu0 %v121
    %280 = vmatpush.xpose.msra.mxu0 %v120
    %281 = vmatpush.xpose.msra.mxu0 %v119
    %282 = vmatpush.xpose.msra.mxu0 %v118
    %283 = vmatpush.xpose.msra.mxu0 %v117
    %284 = vmatpush.xpose.msra.mxu0 %v116
    %285 = vmatpush.xpose.msra.mxu0 %v115
    %286 = vmatpush.xpose.msra.mxu0 %v114
    %287 = vmatpush.xpose.msra.mxu0 %v113
    %288 = vmatpush.xpose.msra.mxu0 %v112
    %289 = vmatpush.xpose.msra.mxu0 %v111
    %290 = vmatpush.xpose.msra.mxu0 %v110
    %291 = vmatpush.xpose.msra.mxu0 %v109
    %292 = vmatpush.xpose.msra.mxu0 %v108
    %293 = vmatpush.xpose.msra.mxu0 %v107
    %294 = vmatpush.xpose.msra.mxu0 %v106
    %295 = vmatmul.f32.gmra.mxu0 %v275
    %v296 = vpop.f32.mrf.mxu0
    %v297 = vadd.f32 0.0, %v296
    %298 = vdwg.mxu0
    %s299 = scalar_lea.vmem [#allocation12], 16
    %300 = vst [vmem:[%s299] sm:$0xff] %v297
    %s301 = scalar_lea.vmem [#allocation3], 16
    %v302 = vld [vmem:[%s301] sm:$0xff]
    %v303 = vsub.f32 %v302, %v297
    %s304 = scalar_lea.vmem [#allocation6], 16
    %v305 = vld [vmem:[%s304] sm:$0xff]
    %v306 = vmul.f32 %v303, %v305
    %307 = vmatpush.msra.mxu0 %v121
    %308 = vmatpush.msra.mxu0 %v120
    %309 = vmatpush.msra.mxu0 %v119
    %310 = vmatpush.msra.mxu0 %v118
    %311 = vmatpush.msra.mxu0 %v117
    %312 = vmatpush.msra.mxu0 %v116
    %313 = vmatpush.msra.mxu0 %v115
    %314 = vmatpush.msra.mxu0 %v114
    %315 = vmatpush.msra.mxu0 %v113
    %316 = vmatpush.msra.mxu0 %v112
    %317 = vmatpush.msra.mxu0 %v111
    %318 = vmatpush.msra.mxu0 %v110
    %319 = vmatpush.msra.mxu0 %v109
    %320 = vmatpush.msra.mxu0 %v108
    %321 = vmatpush.msra.mxu0 %v107
    %322 = vmatpush.msra.mxu0 %v106
    %323 = vmatmul.f32.gmra.mxu0 %v306
    %v324 = vpop.f32.mrf.mxu0
    %v325 = vadd.f32 0.0, %v324
    %326 = vdwg.mxu0
    %v327 = vsub.f32 %v275, %v325
    %v328 = vtanh.pop %v327
    %329 = vmatpush.msra.mxu0 %v137
    %330 = vmatpush.msra.mxu0 %v136
    %331 = vmatpush.msra.mxu0 %v135
    %332 = vmatpush.msra.mxu0 %v134
    %333 = vmatpush.msra.mxu0 %v133
    %334 = vmatpush.msra.mxu0 %v132
    %335 = vmatpush.msra.mxu0 %v131
    %336 = vmatpush.msra.mxu0 %v130
    %337 = vmatpush.msra.mxu0 %v129
    %338 = vmatpush.msra.mxu0 %v128
    %339 = vmatpush.msra.mxu0 %v127
    %340 = vmatpush.msra.mxu0 %v126
    %341 = vmatpush.msra.mxu0 %v125
    %342 = vmatpush.msra.mxu0 %v124
    %343 = vmatpush.msra.mxu0 %v123
    %344 = vmatpush.msra.mxu0 %v122
    %345 = vmatmul.f32.gmra.mxu0 %v328
    %v346 = vpop.f32.mrf.mxu0
    %v347 = vadd.f32 0.0, %v346
    %348 = vdwg.mxu0
    %s349 = scalar_lea.vmem [#allocation13], 16
    %350 = vst [vmem:[%s349] sm:$0xff] %v347
    %351 = vmatpush.xpose.msra.mxu0 %v121
    %352 = vmatpush.xpose.msra.mxu0 %v120
    %353 = vmatpush.xpose.msra.mxu0 %v119
    %354 = vmatpush.xpose.msra.mxu0 %v118
    %355 = vmatpush.xpose.msra.mxu0 %v117
    %356 = vmatpush.xpose.msra.mxu0 %v116
    %357 = vmatpush.xpose.msra.mxu0 %v115
    %358 = vmatpush.xpose.msra.mxu0 %v114
    %359 = vmatpush.xpose.msra.mxu0 %v113
    %360 = vmatpush.xpose.msra.mxu0 %v112
    %361 = vmatpush.xpose.msra.mxu0 %v111
    %362 = vmatpush.xpose.msra.mxu0 %v110
    %363 = vmatpush.xpose.msra.mxu0 %v109
    %364 = vmatpush.xpose.msra.mxu0 %v108
    %365 = vmatpush.xpose.msra.mxu0 %v107
    %366 = vmatpush.xpose.msra.mxu0 %v106
    %367 = vmatmul.f32.gmra.mxu0 %v347
    %v368 = vpop.f32.mrf.mxu0
    %v369 = vadd.f32 0.0, %v368
    %370 = vdwg.mxu0
    %s371 = scalar_lea.vmem [#allocation12], 24
    %372 = vst [vmem:[%s371] sm:$0xff] %v369
    %s373 = scalar_lea.vmem [#allocation3], 24
    %v374 = vld [vmem:[%s373] sm:$0xff]
    %v375 = vsub.f32 %v374, %v369
    %s376 = scalar_lea.vmem [#allocation6], 24
    %v377 = vld [vmem:[%s376] sm:$0xff]
    %v378 = vmul.f32 %v375, %v377
    %379 = vmatpush.msra.mxu0 %v121
    %380 = vmatpush.msra.mxu0 %v120
    %381 = vmatpush.msra.mxu0 %v119
    %382 = vmatpush.msra.mxu0 %v118
    %383 = vmatpush.msra.mxu0 %v117
    %384 = vmatpush.msra.mxu0 %v116
    %385 = vmatpush.msra.mxu0 %v115
    %386 = vmatpush.msra.mxu0 %v114
    %387 = vmatpush.msra.mxu0 %v113
    %388 = vmatpush.msra.mxu0 %v112
    %389 = vmatpush.msra.mxu0 %v111
    %390 = vmatpush.msra.mxu0 %v110
    %391 = vmatpush.msra.mxu0 %v109
    %392 = vmatpush.msra.mxu0 %v108
    %393 = vmatpush.msra.mxu0 %v107
    %394 = vmatpush.msra.mxu0 %v106
    %395 = vmatmul.f32.gmra.mxu0 %v378
    %v396 = vpop.f32.mrf.mxu0
    %v397 = vadd.f32 0.0, %v396
    %398 = vdwg.mxu0
    %v399 = vsub.f32 %v347, %v397
    %v400 = vtanh.pop %v399
    %401 = vmatpush.msra.mxu0 %v137
    %402 = vmatpush.msra.mxu0 %v136
    %403 = vmatpush.msra.mxu0 %v135
    %404 = vmatpush.msra.mxu0 %v134
    %405 = vmatpush.msra.mxu0 %v133
    %406 = vmatpush.msra.mxu0 %v132
    %407 = vmatpush.msra.mxu0 %v131
    %408 = vmatpush.msra.mxu0 %v130
    %409 = vmatpush.msra.mxu0 %v129
    %410 = vmatpush.msra.mxu0 %v128
    %411 = vmatpush.msra.mxu0 %v127
    %412 = vmatpush.msra.mxu0 %v126
    %413 = vmatpush.msra.mxu0 %v125
    %414 = vmatpush.msra.mxu0 %v124
    %415 = vmatpush.msra.mxu0 %v123
    %416 = vmatpush.msra.mxu0 %v122
    %417 = vmatmul.f32.gmra.mxu0 %v400
    %v418 = vpop.f32.mrf.mxu0
    %v419 = vadd.f32 0.0, %v418
    %420 = vdwg.mxu0
    %s421 = scalar_lea.vmem [#allocation13], 24
    %422 = vst [vmem:[%s421] sm:$0xff] %v419
    %423 = vmatpush.xpose.msra.mxu0 %v121
    %424 = vmatpush.xpose.msra.mxu0 %v120
    %425 = vmatpush.xpose.msra.mxu0 %v119
    %426 = vmatpush.xpose.msra.mxu0 %v118
    %427 = vmatpush.xpose.msra.mxu0 %v117
    %428 = vmatpush.xpose.msra.mxu0 %v116
    %429 = vmatpush.xpose.msra.mxu0 %v115
    %430 = vmatpush.xpose.msra.mxu0 %v114
    %431 = vmatpush.xpose.msra.mxu0 %v113
    %432 = vmatpush.xpose.msra.mxu0 %v112
    %433 = vmatpush.xpose.msra.mxu0 %v111
    %434 = vmatpush.xpose.msra.mxu0 %v110
    %435 = vmatpush.xpose.msra.mxu0 %v109
    %436 = vmatpush.xpose.msra.mxu0 %v108
    %437 = vmatpush.xpose.msra.mxu0 %v107
    %438 = vmatpush.xpose.msra.mxu0 %v106
    %439 = vmatmul.f32.gmra.mxu0 %v419
    %v440 = vpop.f32.mrf.mxu0
    %v441 = vadd.f32 0.0, %v440
    %442 = vdwg.mxu0
    %s443 = scalar_lea.vmem [#allocation12], 32
    %444 = vst [vmem:[%s443] sm:$0xff] %v441
    %s445 = scalar_lea.vmem [#allocation3], 32
    %v446 = vld [vmem:[%s445] sm:$0xff]
    %v447 = vsub.f32 %v446, %v441
    %s448 = scalar_lea.vmem [#allocation6], 32
    %v449 = vld [vmem:[%s448] sm:$0xff]
    %v450 = vmul.f32 %v447, %v449
    %451 = vmatpush.msra.mxu0 %v121
    %452 = vmatpush.msra.mxu0 %v120
    %453 = vmatpush.msra.mxu0 %v119
    %454 = vmatpush.msra.mxu0 %v118
    %455 = vmatpush.msra.mxu0 %v117
    %456 = vmatpush.msra.mxu0 %v116
    %457 = vmatpush.msra.mxu0 %v115
    %458 = vmatpush.msra.mxu0 %v114
    %459 = vmatpush.msra.mxu0 %v113
    %460 = vmatpush.msra.mxu0 %v112
    %461 = vmatpush.msra.mxu0 %v111
    %462 = vmatpush.msra.mxu0 %v110
    %463 = vmatpush.msra.mxu0 %v109
    %464 = vmatpush.msra.mxu0 %v108
    %465 = vmatpush.msra.mxu0 %v107
    %466 = vmatpush.msra.mxu0 %v106
    %467 = vmatmul.f32.gmra.mxu0 %v450
    %v468 = vpop.f32.mrf.mxu0
    %v469 = vadd.f32 0.0, %v468
    %470 = vdwg.mxu0
    %v471 = vsub.f32 %v419, %v469
    %v472 = vtanh.pop %v471
    %473 = vmatpush.msra.mxu0 %v137
    %474 = vmatpush.msra.mxu0 %v136
    %475 = vmatpush.msra.mxu0 %v135
    %476 = vmatpush.msra.mxu0 %v134
    %477 = vmatpush.msra.mxu0 %v133
    %478 = vmatpush.msra.mxu0 %v132
    %479 = vmatpush.msra.mxu0 %v131
    %480 = vmatpush.msra.mxu0 %v130
    %481 = vmatpush.msra.mxu0 %v129
    %482 = vmatpush.msra.mxu0 %v128
    %483 = vmatpush.msra.mxu0 %v127
    %484 = vmatpush.msra.mxu0 %v126
    %485 = vmatpush.msra.mxu0 %v125
    %486 = vmatpush.msra.mxu0 %v124
    %487 = vmatpush.msra.mxu0 %v123
    %488 = vmatpush.msra.mxu0 %v122
    %489 = vmatmul.f32.gmra.mxu0 %v472
    %v490 = vpop.f32.mrf.mxu0
    %v491 = vadd.f32 0.0, %v490
    %492 = vdwg.mxu0
    %s493 = scalar_lea.vmem [#allocation13], 32
    %494 = vst [vmem:[%s493] sm:$0xff] %v491
    %495 = vmatpush.xpose.msra.mxu0 %v121
    %496 = vmatpush.xpose.msra.mxu0 %v120
    %497 = vmatpush.xpose.msra.mxu0 %v119
    %498 = vmatpush.xpose.msra.mxu0 %v118
    %499 = vmatpush.xpose.msra.mxu0 %v117
    %500 = vmatpush.xpose.msra.mxu0 %v116
    %501 = vmatpush.xpose.msra.mxu0 %v115
    %502 = vmatpush.xpose.msra.mxu0 %v114
    %503 = vmatpush.xpose.msra.mxu0 %v113
    %504 = vmatpush.xpose.msra.mxu0 %v112
    %505 = vmatpush.xpose.msra.mxu0 %v111
    %506 = vmatpush.xpose.msra.mxu0 %v110
    %507 = vmatpush.xpose.msra.mxu0 %v109
    %508 = vmatpush.xpose.msra.mxu0 %v108
    %509 = vmatpush.xpose.msra.mxu0 %v107
    %510 = vmatpush.xpose.msra.mxu0 %v106
    %511 = vmatmul.f32.gmra.mxu0 %v491
    %v512 = vpop.f32.mrf.mxu0
    %v513 = vadd.f32 0.0, %v512
    %514 = vdwg.mxu0
    %s515 = scalar_lea.vmem [#allocation12], 40
    %516 = vst [vmem:[%s515] sm:$0xff] %v513
    %s517 = scalar_lea.vmem [#allocation3], 40
    %v518 = vld [vmem:[%s517] sm:$0xff]
    %v519 = vsub.f32 %v518, %v513
    %s520 = scalar_lea.vmem [#allocation6], 40
    %v521 = vld [vmem:[%s520] sm:$0xff]
    %v522 = vmul.f32 %v519, %v521
    %523 = vmatpush.msra.mxu0 %v121
    %524 = vmatpush.msra.mxu0 %v120
    %525 = vmatpush.msra.mxu0 %v119
    %526 = vmatpush.msra.mxu0 %v118
    %527 = vmatpush.msra.mxu0 %v117
    %528 = vmatpush.msra.mxu0 %v116
    %529 = vmatpush.msra.mxu0 %v115
    %530 = vmatpush.msra.mxu0 %v114
    %531 = vmatpush.msra.mxu0 %v113
    %532 = vmatpush.msra.mxu0 %v112
    %533 = vmatpush.msra.mxu0 %v111
    %534 = vmatpush.msra.mxu0 %v110
    %535 = vmatpush.msra.mxu0 %v109
    %536 = vmatpush.msra.mxu0 %v108
    %537 = vmatpush.msra.mxu0 %v107
    %538 = vmatpush.msra.mxu0 %v106
    %539 = vmatmul.f32.gmra.mxu0 %v522
    %v540 = vpop.f32.mrf.mxu0
    %v541 = vadd.f32 0.0, %v540
    %542 = vdwg.mxu0
    %v543 = vsub.f32 %v491, %v541
    %v544 = vtanh.pop %v543
    %545 = vmatpush.msra.mxu0 %v137
    %546 = vmatpush.msra.mxu0 %v136
    %547 = vmatpush.msra.mxu0 %v135
    %548 = vmatpush.msra.mxu0 %v134
    %549 = vmatpush.msra.mxu0 %v133
    %550 = vmatpush.msra.mxu0 %v132
    %551 = vmatpush.msra.mxu0 %v131
    %552 = vmatpush.msra.mxu0 %v130
    %553 = vmatpush.msra.mxu0 %v129
    %554 = vmatpush.msra.mxu0 %v128
    %555 = vmatpush.msra.mxu0 %v127
    %556 = vmatpush.msra.mxu0 %v126
    %557 = vmatpush.msra.mxu0 %v125
    %558 = vmatpush.msra.mxu0 %v124
    %559 = vmatpush.msra.mxu0 %v123
    %560 = vmatpush.msra.mxu0 %v122
    %561 = vmatmul.f32.gmra.mxu0 %v544
    %v562 = vpop.f32.mrf.mxu0
    %v563 = vadd.f32 0.0, %v562
    %564 = vdwg.mxu0
    %s565 = scalar_lea.vmem [#allocation13], 40
    %566 = vst [vmem:[%s565] sm:$0xff] %v563
    %567 = vmatpush.xpose.msra.mxu0 %v121
    %568 = vmatpush.xpose.msra.mxu0 %v120
    %569 = vmatpush.xpose.msra.mxu0 %v119
    %570 = vmatpush.xpose.msra.mxu0 %v118
    %571 = vmatpush.xpose.msra.mxu0 %v117
    %572 = vmatpush.xpose.msra.mxu0 %v116
    %573 = vmatpush.xpose.msra.mxu0 %v115
    %574 = vmatpush.xpose.msra.mxu0 %v114
    %575 = vmatpush.xpose.msra.mxu0 %v113
    %576 = vmatpush.xpose.msra.mxu0 %v112
    %577 = vmatpush.xpose.msra.mxu0 %v111
    %578 = vmatpush.xpose.msra.mxu0 %v110
    %579 = vmatpush.xpose.msra.mxu0 %v109
    %580 = vmatpush.xpose.msra.mxu0 %v108
    %581 = vmatpush.xpose.msra.mxu0 %v107
    %582 = vmatpush.xpose.msra.mxu0 %v106
    %583 = vmatmul.f32.gmra.mxu0 %v563
    %v584 = vpop.f32.mrf.mxu0
    %v585 = vadd.f32 0.0, %v584
    %586 = vdwg.mxu0
    %s587 = scalar_lea.vmem [#allocation12], 48
    %588 = vst [vmem:[%s587] sm:$0xff] %v585
    %s589 = scalar_lea.vmem [#allocation3], 48
    %v590 = vld [vmem:[%s589] sm:$0xff]
    %v591 = vsub.f32 %v590, %v585
    %s592 = scalar_lea.vmem [#allocation6], 48
    %v593 = vld [vmem:[%s592] sm:$0xff]
    %v594 = vmul.f32 %v591, %v593
    %595 = vmatpush.msra.mxu0 %v121
    %596 = vmatpush.msra.mxu0 %v120
    %597 = vmatpush.msra.mxu0 %v119
    %598 = vmatpush.msra.mxu0 %v118
    %599 = vmatpush.msra.mxu0 %v117
    %600 = vmatpush.msra.mxu0 %v116
    %601 = vmatpush.msra.mxu0 %v115
    %602 = vmatpush.msra.mxu0 %v114
    %603 = vmatpush.msra.mxu0 %v113
    %604 = vmatpush.msra.mxu0 %v112
    %605 = vmatpush.msra.mxu0 %v111
    %606 = vmatpush.msra.mxu0 %v110
    %607 = vmatpush.msra.mxu0 %v109
    %608 = vmatpush.msra.mxu0 %v108
    %609 = vmatpush.msra.mxu0 %v107
    %610 = vmatpush.msra.mxu0 %v106
    %611 = vmatmul.f32.gmra.mxu0 %v594
    %v612 = vpop.f32.mrf.mxu0
    %v613 = vadd.f32 0.0, %v612
    %614 = vdwg.mxu0
    %v615 = vsub.f32 %v563, %v613
    %v616 = vtanh.pop %v615
    %617 = vmatpush.msra.mxu0 %v137
    %618 = vmatpush.msra.mxu0 %v136
    %619 = vmatpush.msra.mxu0 %v135
    %620 = vmatpush.msra.mxu0 %v134
    %621 = vmatpush.msra.mxu0 %v133
    %622 = vmatpush.msra.mxu0 %v132
    %623 = vmatpush.msra.mxu0 %v131
    %624 = vmatpush.msra.mxu0 %v130
    %625 = vmatpush.msra.mxu0 %v129
    %626 = vmatpush.msra.mxu0 %v128
    %627 = vmatpush.msra.mxu0 %v127
    %628 = vmatpush.msra.mxu0 %v126
    %629 = vmatpush.msra.mxu0 %v125
    %630 = vmatpush.msra.mxu0 %v124
    %631 = vmatpush.msra.mxu0 %v123
    %632 = vmatpush.msra.mxu0 %v122
    %633 = vmatmul.f32.gmra.mxu0 %v616
    %v634 = vpop.f32.mrf.mxu0
    %v635 = vadd.f32 0.0, %v634
    %636 = vdwg.mxu0
    %s637 = scalar_lea.vmem [#allocation13], 48
    %638 = vst [vmem:[%s637] sm:$0xff] %v635
    %639 = vmatpush.xpose.msra.mxu0 %v121
    %640 = vmatpush.xpose.msra.mxu0 %v120
    %641 = vmatpush.xpose.msra.mxu0 %v119
    %642 = vmatpush.xpose.msra.mxu0 %v118
    %643 = vmatpush.xpose.msra.mxu0 %v117
    %644 = vmatpush.xpose.msra.mxu0 %v116
    %645 = vmatpush.xpose.msra.mxu0 %v115
    %646 = vmatpush.xpose.msra.mxu0 %v114
    %647 = vmatpush.xpose.msra.mxu0 %v113
    %648 = vmatpush.xpose.msra.mxu0 %v112
    %649 = vmatpush.xpose.msra.mxu0 %v111
    %650 = vmatpush.xpose.msra.mxu0 %v110
    %651 = vmatpush.xpose.msra.mxu0 %v109
    %652 = vmatpush.xpose.msra.mxu0 %v108
    %653 = vmatpush.xpose.msra.mxu0 %v107
    %654 = vmatpush.xpose.msra.mxu0 %v106
    %655 = vmatmul.f32.gmra.mxu0 %v635
    %v656 = vpop.f32.mrf.mxu0
    %v657 = vadd.f32 0.0, %v656
    %658 = vdwg.mxu0
    %s659 = scalar_lea.vmem [#allocation12], 56
    %660 = vst [vmem:[%s659] sm:$0xff] %v657
    %s661 = scalar_lea.vmem [#allocation3], 56
    %v662 = vld [vmem:[%s661] sm:$0xff]
    %v663 = vsub.f32 %v662, %v657
    %s664 = scalar_lea.vmem [#allocation6], 56
    %v665 = vld [vmem:[%s664] sm:$0xff]
    %v666 = vmul.f32 %v663, %v665
    %667 = vmatpush.msra.mxu0 %v121
    %668 = vmatpush.msra.mxu0 %v120
    %669 = vmatpush.msra.mxu0 %v119
    %670 = vmatpush.msra.mxu0 %v118
    %671 = vmatpush.msra.mxu0 %v117
    %672 = vmatpush.msra.mxu0 %v116
    %673 = vmatpush.msra.mxu0 %v115
    %674 = vmatpush.msra.mxu0 %v114
    %675 = vmatpush.msra.mxu0 %v113
    %676 = vmatpush.msra.mxu0 %v112
    %677 = vmatpush.msra.mxu0 %v111
    %678 = vmatpush.msra.mxu0 %v110
    %679 = vmatpush.msra.mxu0 %v109
    %680 = vmatpush.msra.mxu0 %v108
    %681 = vmatpush.msra.mxu0 %v107
    %682 = vmatpush.msra.mxu0 %v106
    %683 = vmatmul.f32.gmra.mxu0 %v666
    %v684 = vpop.f32.mrf.mxu0
    %v685 = vadd.f32 0.0, %v684
    %686 = vdwg.mxu0
    %v687 = vsub.f32 %v635, %v685
    %v688 = vtanh.pop %v687
    %689 = vmatpush.msra.mxu0 %v137
    %690 = vmatpush.msra.mxu0 %v136
    %691 = vmatpush.msra.mxu0 %v135
    %692 = vmatpush.msra.mxu0 %v134
    %693 = vmatpush.msra.mxu0 %v133
    %694 = vmatpush.msra.mxu0 %v132
    %695 = vmatpush.msra.mxu0 %v131
    %696 = vmatpush.msra.mxu0 %v130
    %697 = vmatpush.msra.mxu0 %v129
    %698 = vmatpush.msra.mxu0 %v128
    %699 = vmatpush.msra.mxu0 %v127
    %700 = vmatpush.msra.mxu0 %v126
    %701 = vmatpush.msra.mxu0 %v125
    %702 = vmatpush.msra.mxu0 %v124
    %703 = vmatpush.msra.mxu0 %v123
    %704 = vmatpush.msra.mxu0 %v122
    %705 = vmatmul.f32.gmra.mxu0 %v688
    %v706 = vpop.f32.mrf.mxu0
    %v707 = vadd.f32 0.0, %v706
    %708 = vdwg.mxu0
    %s709 = scalar_lea.vmem [#allocation13], 56
    %710 = vst [vmem:[%s709] sm:$0xff] %v707
    %711 = vst [vmem:[#allocation2] sm:$0xff] %v707
    // Predicated region
    $region46: #{tpu_custom_call.1} parent=1 // pred_check
      _
    $region47: #{tpu_custom_call.1} parent=1 // pred_check_branch
      %713 = sbr.rel (0) target = $region49
    $region48: #{tpu_custom_call.1} parent=1 // pred_region
      %715 = vsyncadd [#allocation5], 0
      %s716 = sshll.u32 [#allocation12], 4
      %s717 = int_to_ptr.vmem [resolvable:$true] %s716
      %s718 = sshll.u32 %s5, 4
      %s719 = int_to_ptr.hbm [resolvable:$true] %s718
      %724 = dma.vmem_to_hbm [thread:$0]  %s717, 1024, %s719, [#allocation5], 128, 128, 8
    $region49: #{tpu_custom_call.1} parent=1 // pred_fallthru
      _
    // Predicated region
    $region50: #{tpu_custom_call.1} parent=1 // pred_check
      _
    $region51: #{tpu_custom_call.1} parent=1 // pred_check_branch
      %726 = sbr.rel (0) target = $region53
    $region52: #{tpu_custom_call.1} parent=1 // pred_region
      %728 = vsyncadd [#allocation14], 0
      %s729 = sshll.u32 [#allocation13], 4
      %s730 = int_to_ptr.vmem [resolvable:$true] %s729
      %s731 = sshll.u32 %s6, 4
      %s732 = int_to_ptr.hbm [resolvable:$true] %s731
      %737 = dma.vmem_to_hbm [thread:$0]  %s730, 1024, %s732, [#allocation14], 128, 128, 8
    $region53: #{tpu_custom_call.1} parent=1 // pred_fallthru
      _
    // Predicated region
    $region54: #{tpu_custom_call.1} parent=1 // pred_check
      _
    $region55: #{tpu_custom_call.1} parent=1 // pred_check_branch
      %739 = sbr.rel (0) target = $region57
    $region56: #{tpu_custom_call.1} parent=1 // pred_region
      %741 = dma.done [#allocation5], 1024
    $region57: #{tpu_custom_call.1} parent=1 // pred_fallthru
      _
    // Predicated region
    $region58: #{tpu_custom_call.1} parent=1 // pred_check
      _
    $region59: #{tpu_custom_call.1} parent=1 // pred_check_branch
      %743 = sbr.rel (0) target = $region61
    $region60: #{tpu_custom_call.1} parent=1 // pred_region
      %745 = dma.done [#allocation14], 1024
    $region61: #{tpu_custom_call.1} parent=1 // pred_fallthru
      _
    %746 = vsyncpa [#allocation4], 1
    %747 = vsyncpa [#allocation7], 1
    %748 = vsyncpa [#allocation10], 1
    %749 = vsyncpa [#allocation5], 1
    %750 = vsyncpa [#allocation14], 1

</llo_original>
